<compile_context>
chip_gen: v5e
topology: v5e:2x2
jax: 0.10.0
libtpu: 0.0.40
codegen_flags: <defaults>
</compile_context>

<pallas_src>
import jax
import jax.numpy as jnp
from jax import lax
from jax.experimental import pallas as pl
from jax.experimental.pallas import tpu as pltpu

# ----------------------------- model hyper-parameters -----------------------------
NUM_CLASSES = 8
INPUT_SIZE  = 16
HIDDEN_SIZE = 32
NUM_LAYERS  = 2
SEQ_LEN     = 8
BATCH       = 4
FC1_SIZE    = 128          # nn.Linear(hidden_size, 128)

_VMEM = pl.BlockSpec(memory_space=pltpu.MemorySpace.VMEM)   # whole array resident in VMEM


# --------------------------------- fused kernel ------------------------------------
def make_fused_lstm_kernel(num_layers, seq_len, hidden):
    T = seq_len
    H = hidden
    G = 4 * H

    def kernel(x_ref, *refs):
        # refs = [w_ih_0, w_hh_0, b_0, ..., w_ih_{L-1}, w_hh_{L-1}, b_{L-1},
        #         fc1_w, fc1_b, fc2_w, fc2_b, out_ref, hbuf_scratch]
        hbuf_ref = refs[-1]            # VMEM scratch (B, T, H): inter-layer activations
        out_ref = refs[-2]
        layer_refs = refs[:3 * num_layers]
        fc1_w_ref, fc1_b_ref, fc2_w_ref, fc2_b_ref = refs[3 * num_layers:3 * num_layers + 4]

        B = x_ref.shape[0]
        D = x_ref.shape[2]

        # Lane mask selecting the g (cell-candidate) gate lanes [2H, 3H).
        # Built ONCE (broadcasts are not CSE'd; keep it out of the unrolled loop).
        lane = lax.broadcasted_iota(jnp.int32, (B, G), 1)
        is_g = jnp.logical_and(lane >= 2 * H, lane < 3 * H)

        x_in = x_ref[...].reshape(B * T, D)      # batch-first flat: row = b*T + t
        h_finals = []

        for l in range(num_layers):
            w_ih = layer_refs[3 * l + 0][...]    # (D_in, 4H)  pre-transposed
            w_hh = layer_refs[3 * l + 1][...]    # (H, 4H)     pre-transposed
            b    = layer_refs[3 * l + 2][...]    # (1, 4H)     b_ih + b_hh

            # Hoisted input projection: one MXU matmul + one bias add per layer.
            gx = jnp.dot(x_in, w_ih, preferred_element_type=jnp.float32) + b   # (B*T, 4H)
            gx = gx.reshape(B, T, G)

            h = jnp.zeros((B, H), jnp.float32)
            c = jnp.zeros((B, H), jnp.float32)

            for t in range(T):                   # fully unrolled (T static & tiny)
                gates = gx[:, t, :] + jnp.dot(h, w_hh,
                                              preferred_element_type=jnp.float32)  # (B, 4H)
                # Single full-vreg EUP pass:
                #   i/f/o lanes: sigmoid(z) = 0.5*tanh(0.5*z) + 0.5
                #   g     lanes: tanh(z)
                th = jnp.tanh(jnp.where(is_g, gates, 0.5 * gates))
                act = jnp.where(is_g, th, 0.5 * th + 0.5)
                i_g = act[:, 0 * H:1 * H]
                f_g = act[:, 1 * H:2 * H]
                g_g = act[:, 2 * H:3 * H]
                o_g = act[:, 3 * H:4 * H]
                c = f_g * c + i_g * g_g
                h = o_g * jnp.tanh(c)
                if l + 1 < num_layers:           # stash per-step h for the next layer
                    hbuf_ref[:, t, :] = h

            h_finals.append(h)
            if l + 1 < num_layers:
                x_in = hbuf_ref[...].reshape(B * T, H)

        # hn.view(-1, H): layer-major stacking of the final hidden states.
        hn = jnp.concatenate(h_finals, axis=0) if num_layers > 1 else h_finals[0]
        z = jnp.maximum(hn, 0.0)                                   # relu
        z = jnp.dot(z, fc1_w_ref[...], preferred_element_type=jnp.float32) + fc1_b_ref[...]
        z = jnp.maximum(z, 0.0)                                    # relu
        out_ref[...] = (jnp.dot(z, fc2_w_ref[...], preferred_element_type=jnp.float32)
                        + fc2_b_ref[...])

    return kernel


# ------------------------------------ wrapper ---------------------------------------
@jax.jit
def lstm_forward(x, params):
    """x: (B, T, INPUT_SIZE) batch_first; returns (NUM_LAYERS*B, NUM_CLASSES)."""
    B, T, _ = x.shape
    H = HIDDEN_SIZE
    L = len(params["lstm"])
    C = params["fc_b"].shape[-1]

    inputs = [x.astype(jnp.float32)]
    for (w_ih_t, w_hh_t, b) in params["lstm"]:
        inputs += [w_ih_t, w_hh_t, b]
    inputs += [params["fc1_w_t"], params["fc1_b"], params["fc_w_t"], params["fc_b"]]

    return pl.pallas_call(
        make_fused_lstm_kernel(L, T, H),
        out_shape=jax.ShapeDtypeStruct((L * B, C), jnp.float32),
        in_specs=[_VMEM] * len(inputs),
        out_specs=_VMEM,
        scratch_shapes=[pltpu.VMEM((B, T, H), jnp.float32)],
    )(*inputs)


# --------------------------------- parameter init -----------------------------------
def init_params(key):
    bound = 1.0 / (HIDDEN_SIZE ** 0.5)
    params = {"lstm": []}
    for layer in range(NUM_LAYERS):
        d_in = INPUT_SIZE if layer == 0 else HIDDEN_SIZE
        key, k1, k2, k3, k4 = jax.random.split(key, 5)
        w_ih = jax.random.uniform(k1, (4 * HIDDEN_SIZE, d_in), jnp.float32, -bound, bound)
        w_hh = jax.random.uniform(k2, (4 * HIDDEN_SIZE, HIDDEN_SIZE), jnp.float32, -bound, bound)
        b_ih = jax.random.uniform(k3, (4 * HIDDEN_SIZE,), jnp.float32, -bound, bound)
        b_hh = jax.random.uniform(k4, (4 * HIDDEN_SIZE,), jnp.float32, -bound, bound)
        params["lstm"].append((w_ih.T, w_hh.T, (b_ih + b_hh)[None, :]))
    key, k5, k6, k7, k8 = jax.random.split(key, 5)
    b1 = 1.0 / (HIDDEN_SIZE ** 0.5)
    fc1_w = jax.random.uniform(k5, (FC1_SIZE, HIDDEN_SIZE), jnp.float32, -b1, b1)
    fc1_b = jax.random.uniform(k6, (FC1_SIZE,), jnp.float32, -b1, b1)
    b2 = 1.0 / (FC1_SIZE ** 0.5)
    fc_w = jax.random.uniform(k7, (NUM_CLASSES, FC1_SIZE), jnp.float32, -b2, b2)
    fc_b = jax.random.uniform(k8, (NUM_CLASSES,), jnp.float32, -b2, b2)
    params["fc1_w_t"] = fc1_w.T
    params["fc1_b"] = fc1_b[None, :]
    params["fc_w_t"] = fc_w.T
    params["fc_b"] = fc_b[None, :]
    return params


# --------------------------------- pure-JAX reference --------------------------------
def reference_forward(x, params):
    B = x.shape[0]
    H = HIDDEN_SIZE
    hi = lax.Precision.HIGHEST
    x_tm = jnp.transpose(x, (1, 0, 2)).astype(jnp.float32)   # (T, B, D)
    finals = []
    for (w_ih_t, w_hh_t, b) in params["lstm"]:
        def step(carry, x_t, w_ih_t=w_ih_t, w_hh_t=w_hh_t, b=b):
            hh, cc = carry
            gates = (jnp.dot(x_t, w_ih_t, precision=hi)
                     + jnp.dot(hh, w_hh_t, precision=hi) + b)
            i_g = jax.nn.sigmoid(gates[:, 0 * H:1 * H])
            f_g = jax.nn.sigmoid(gates[:, 1 * H:2 * H])
            g_g = jnp.tanh(gates[:, 2 * H:3 * H])
            o_g = jax.nn.sigmoid(gates[:, 3 * H:4 * H])
            cc = f_g * cc + i_g * g_g
            hh = o_g * jnp.tanh(cc)
            return (hh, cc), hh
        init = (jnp.zeros((B, H), jnp.float32), jnp.zeros((B, H), jnp.float32))
        (h, _c), outs = lax.scan(step, init, x_tm)
        x_tm = outs
        finals.append(h)
    hn = jnp.concatenate(finals, axis=0)                      # (L*B, H) layer-major
    z = jax.nn.relu(hn)
    z = jax.nn.relu(jnp.dot(z, params["fc1_w_t"], precision=hi) + params["fc1_b"])
    return jnp.dot(z, params["fc_w_t"], precision=hi) + params["fc_b"]


# -------------------------------------- main -----------------------------------------
if __name__ == "__main__":
    key = jax.random.PRNGKey(0)
    key, xkey = jax.random.split(key)
    x = jax.random.normal(xkey, (BATCH, SEQ_LEN, INPUT_SIZE), jnp.float32)

    params = init_params(key)

    out = jax.block_until_ready(lstm_forward(x, params))
    ref = jax.block_until_ready(reference_forward(x, params))

    assert out.shape == (NUM_LAYERS * BATCH, NUM_CLASSES), out.shape
    max_err = float(jnp.max(jnp.abs(out - ref)))
    assert jnp.allclose(out, ref, atol=1e-4, rtol=1e-4), f"mismatch vs reference (max abs err {max_err})"

    print("KERNEL_OK")
</pallas_src>

<mosaic_0001>
module attributes {stable_mosaic.version = 11 : i64} {
  func.func @kernel(%arg0: memref<4x8x16xf32, #tpu.memory_space<vmem>>, %arg1: memref<16x128xf32, #tpu.memory_space<vmem>>, %arg2: memref<32x128xf32, #tpu.memory_space<vmem>>, %arg3: memref<1x128xf32, #tpu.memory_space<vmem>>, %arg4: memref<32x128xf32, #tpu.memory_space<vmem>>, %arg5: memref<32x128xf32, #tpu.memory_space<vmem>>, %arg6: memref<1x128xf32, #tpu.memory_space<vmem>>, %arg7: memref<32x128xf32, #tpu.memory_space<vmem>>, %arg8: memref<1x128xf32, #tpu.memory_space<vmem>>, %arg9: memref<128x8xf32, #tpu.memory_space<vmem>>, %arg10: memref<1x8xf32, #tpu.memory_space<vmem>>, %arg11: memref<8x8xf32, #tpu.memory_space<vmem>>, %arg12: memref<4x8x32xf32, #tpu.memory_space<vmem>>) attributes {dimension_semantics = [], scalar_prefetch = 0 : i64, scratch_operands = 1 : i64, tpu.core_type = #tpu.core_type<tc>} {
    %0 = tpu.iota {dimensions = array<i32: 1>} : vector<4x128xi32>
    %c64_i32 = arith.constant 64 : i32
    %1 = vector.broadcast %c64_i32 : i32 to vector<4x128xi32>
    %2 = arith.cmpi sge, %0, %1 : vector<4x128xi32>
    %c96_i32 = arith.constant 96 : i32
    %3 = vector.broadcast %c96_i32 : i32 to vector<4x128xi32>
    %4 = arith.cmpi slt, %0, %3 : vector<4x128xi32>
    %5 = arith.andi %2, %4 : vector<4x128xi1>
    %c0 = arith.constant 0 : index
    %c0_0 = arith.constant 0 : index
    %c0_1 = arith.constant 0 : index
    %6 = vector.load %arg0[%c0, %c0_0, %c0_1] : memref<4x8x16xf32, #tpu.memory_space<vmem>>, vector<4x8x16xf32>
    %7 = vector.shape_cast %6 : vector<4x8x16xf32> to vector<32x16xf32>
    %c0_2 = arith.constant 0 : index
    %c0_3 = arith.constant 0 : index
    %8 = vector.load %arg1[%c0_2, %c0_3] : memref<16x128xf32, #tpu.memory_space<vmem>>, vector<16x128xf32>
    %c0_4 = arith.constant 0 : index
    %c0_5 = arith.constant 0 : index
    %9 = vector.load %arg2[%c0_4, %c0_5] : memref<32x128xf32, #tpu.memory_space<vmem>>, vector<32x128xf32>
    %c0_6 = arith.constant 0 : index
    %c0_7 = arith.constant 0 : index
    %10 = vector.load %arg3[%c0_6, %c0_7] : memref<1x128xf32, #tpu.memory_space<vmem>>, vector<1x128xf32>
    %cst = arith.constant dense<0.000000e+00> : vector<32x128xf32>
    %11 = tpu.matmul %7, %8, %cst {dimension_numbers = #tpu.dot_dimension_numbers<[1], [0], [0], [1], [0, 0, 1, 1], [], []>} : vector<32x16xf32>, vector<16x128xf32>, vector<32x128xf32> -> vector<32x128xf32>
    %12 = vector.broadcast %10 : vector<1x128xf32> to vector<32x128xf32>
    %13 = arith.addf %11, %12 : vector<32x128xf32>
    %14 = vector.shape_cast %13 : vector<32x128xf32> to vector<4x8x128xf32>
    %cst_8 = arith.constant 0.000000e+00 : f32
    %15 = vector.broadcast %cst_8 : f32 to vector<4x32xf32>
    %cst_9 = arith.constant 0.000000e+00 : f32
    %16 = vector.broadcast %cst_9 : f32 to vector<4x32xf32>
    %17 = vector.extract_strided_slice %14 {offsets = [0, 0, 0], sizes = [4, 1, 128], strides = [1, 1, 1]} : vector<4x8x128xf32> to vector<4x1x128xf32>
    %18 = vector.shape_cast %17 : vector<4x1x128xf32> to vector<4x128xf32>
    %cst_10 = arith.constant dense<0.000000e+00> : vector<4x128xf32>
    %19 = tpu.matmul %15, %9, %cst_10 {dimension_numbers = #tpu.dot_dimension_numbers<[1], [0], [0], [1], [0, 0, 1, 1], [], []>} : vector<4x32xf32>, vector<32x128xf32>, vector<4x128xf32> -> vector<4x128xf32>
    %20 = arith.addf %18, %19 : vector<4x128xf32>
    %cst_11 = arith.constant 5.000000e-01 : f32
    %21 = vector.broadcast %cst_11 : f32 to vector<4x128xf32>
    %22 = arith.mulf %21, %20 : vector<4x128xf32>
    %23 = arith.select %5, %20, %22 : vector<4x128xi1>, vector<4x128xf32>
    %24 = math.tanh %23 : vector<4x128xf32>
    %cst_12 = arith.constant 5.000000e-01 : f32
    %25 = vector.broadcast %cst_12 : f32 to vector<4x128xf32>
    %26 = arith.mulf %25, %24 : vector<4x128xf32>
    %cst_13 = arith.constant 5.000000e-01 : f32
    %27 = vector.broadcast %cst_13 : f32 to vector<4x128xf32>
    %28 = arith.addf %26, %27 : vector<4x128xf32>
    %29 = arith.select %5, %24, %28 : vector<4x128xi1>, vector<4x128xf32>
    %30 = vector.extract_strided_slice %29 {offsets = [0, 0], sizes = [4, 32], strides = [1, 1]} : vector<4x128xf32> to vector<4x32xf32>
    %31 = vector.extract_strided_slice %29 {offsets = [0, 32], sizes = [4, 32], strides = [1, 1]} : vector<4x128xf32> to vector<4x32xf32>
    %32 = vector.extract_strided_slice %29 {offsets = [0, 64], sizes = [4, 32], strides = [1, 1]} : vector<4x128xf32> to vector<4x32xf32>
    %33 = vector.extract_strided_slice %29 {offsets = [0, 96], sizes = [4, 32], strides = [1, 1]} : vector<4x128xf32> to vector<4x32xf32>
    %34 = arith.mulf %31, %16 : vector<4x32xf32>
    %35 = arith.mulf %30, %32 : vector<4x32xf32>
    %36 = arith.addf %34, %35 : vector<4x32xf32>
    %37 = math.tanh %36 : vector<4x32xf32>
    %38 = arith.mulf %33, %37 : vector<4x32xf32>
    %c0_14 = arith.constant 0 : index
    %c0_15 = arith.constant 0 : index
    %c0_16 = arith.constant 0 : index
    %39 = vector.load %arg12[%c0_14, %c0_15, %c0_16] : memref<4x8x32xf32, #tpu.memory_space<vmem>>, vector<4x1x32xf32>
    %40 = vector.shape_cast %39 : vector<4x1x32xf32> to vector<4x32xf32>
    %41 = vector.shape_cast %38 : vector<4x32xf32> to vector<4x1x32xf32>
    tpu.vector_store %arg12[%c0_14, %c0_15, %c0_16], %41 {strides = array<i32>} : memref<4x8x32xf32, #tpu.memory_space<vmem>>, vector<4x1x32xf32>,
    %42 = vector.extract_strided_slice %14 {offsets = [0, 1, 0], sizes = [4, 1, 128], strides = [1, 1, 1]} : vector<4x8x128xf32> to vector<4x1x128xf32>
    %43 = vector.shape_cast %42 : vector<4x1x128xf32> to vector<4x128xf32>
    %cst_17 = arith.constant dense<0.000000e+00> : vector<4x128xf32>
    %44 = tpu.matmul %38, %9, %cst_17 {dimension_numbers = #tpu.dot_dimension_numbers<[1], [0], [0], [1], [0, 0, 1, 1], [], []>} : vector<4x32xf32>, vector<32x128xf32>, vector<4x128xf32> -> vector<4x128xf32>
    %45 = arith.addf %43, %44 : vector<4x128xf32>
    %cst_18 = arith.constant 5.000000e-01 : f32
    %46 = vector.broadcast %cst_18 : f32 to vector<4x128xf32>
    %47 = arith.mulf %46, %45 : vector<4x128xf32>
    %48 = arith.select %5, %45, %47 : vector<4x128xi1>, vector<4x128xf32>
    %49 = math.tanh %48 : vector<4x128xf32>
    %cst_19 = arith.constant 5.000000e-01 : f32
    %50 = vector.broadcast %cst_19 : f32 to vector<4x128xf32>
    %51 = arith.mulf %50, %49 : vector<4x128xf32>
    %cst_20 = arith.constant 5.000000e-01 : f32
    %52 = vector.broadcast %cst_20 : f32 to vector<4x128xf32>
    %53 = arith.addf %51, %52 : vector<4x128xf32>
    %54 = arith.select %5, %49, %53 : vector<4x128xi1>, vector<4x128xf32>
    %55 = vector.extract_strided_slice %54 {offsets = [0, 0], sizes = [4, 32], strides = [1, 1]} : vector<4x128xf32> to vector<4x32xf32>
    %56 = vector.extract_strided_slice %54 {offsets = [0, 32], sizes = [4, 32], strides = [1, 1]} : vector<4x128xf32> to vector<4x32xf32>
    %57 = vector.extract_strided_slice %54 {offsets = [0, 64], sizes = [4, 32], strides = [1, 1]} : vector<4x128xf32> to vector<4x32xf32>
    %58 = vector.extract_strided_slice %54 {offsets = [0, 96], sizes = [4, 32], strides = [1, 1]} : vector<4x128xf32> to vector<4x32xf32>
    %59 = arith.mulf %56, %36 : vector<4x32xf32>
    %60 = arith.mulf %55, %57 : vector<4x32xf32>
    %61 = arith.addf %59, %60 : vector<4x32xf32>
    %62 = math.tanh %61 : vector<4x32xf32>
    %63 = arith.mulf %58, %62 : vector<4x32xf32>
    %c0_21 = arith.constant 0 : index
    %c1 = arith.constant 1 : index
    %c0_22 = arith.constant 0 : index
    %64 = vector.load %arg12[%c0_21, %c1, %c0_22] : memref<4x8x32xf32, #tpu.memory_space<vmem>>, vector<4x1x32xf32>
    %65 = vector.shape_cast %64 : vector<4x1x32xf32> to vector<4x32xf32>
    %66 = vector.shape_cast %63 : vector<4x32xf32> to vector<4x1x32xf32>
    tpu.vector_store %arg12[%c0_21, %c1, %c0_22], %66 {strides = array<i32>} : memref<4x8x32xf32, #tpu.memory_space<vmem>>, vector<4x1x32xf32>,
    %67 = vector.extract_strided_slice %14 {offsets = [0, 2, 0], sizes = [4, 1, 128], strides = [1, 1, 1]} : vector<4x8x128xf32> to vector<4x1x128xf32>
    %68 = vector.shape_cast %67 : vector<4x1x128xf32> to vector<4x128xf32>
    %cst_23 = arith.constant dense<0.000000e+00> : vector<4x128xf32>
    %69 = tpu.matmul %63, %9, %cst_23 {dimension_numbers = #tpu.dot_dimension_numbers<[1], [0], [0], [1], [0, 0, 1, 1], [], []>} : vector<4x32xf32>, vector<32x128xf32>, vector<4x128xf32> -> vector<4x128xf32>
    %70 = arith.addf %68, %69 : vector<4x128xf32>
    %cst_24 = arith.constant 5.000000e-01 : f32
    %71 = vector.broadcast %cst_24 : f32 to vector<4x128xf32>
    %72 = arith.mulf %71, %70 : vector<4x128xf32>
    %73 = arith.select %5, %70, %72 : vector<4x128xi1>, vector<4x128xf32>
    %74 = math.tanh %73 : vector<4x128xf32>
    %cst_25 = arith.constant 5.000000e-01 : f32
    %75 = vector.broadcast %cst_25 : f32 to vector<4x128xf32>
    %76 = arith.mulf %75, %74 : vector<4x128xf32>
    %cst_26 = arith.constant 5.000000e-01 : f32
    %77 = vector.broadcast %cst_26 : f32 to vector<4x128xf32>
    %78 = arith.addf %76, %77 : vector<4x128xf32>
    %79 = arith.select %5, %74, %78 : vector<4x128xi1>, vector<4x128xf32>
    %80 = vector.extract_strided_slice %79 {offsets = [0, 0], sizes = [4, 32], strides = [1, 1]} : vector<4x128xf32> to vector<4x32xf32>
    %81 = vector.extract_strided_slice %79 {offsets = [0, 32], sizes = [4, 32], strides = [1, 1]} : vector<4x128xf32> to vector<4x32xf32>
    %82 = vector.extract_strided_slice %79 {offsets = [0, 64], sizes = [4, 32], strides = [1, 1]} : vector<4x128xf32> to vector<4x32xf32>
    %83 = vector.extract_strided_slice %79 {offsets = [0, 96], sizes = [4, 32], strides = [1, 1]} : vector<4x128xf32> to vector<4x32xf32>
    %84 = arith.mulf %81, %61 : vector<4x32xf32>
    %85 = arith.mulf %80, %82 : vector<4x32xf32>
    %86 = arith.addf %84, %85 : vector<4x32xf32>
    %87 = math.tanh %86 : vector<4x32xf32>
    %88 = arith.mulf %83, %87 : vector<4x32xf32>
    %c0_27 = arith.constant 0 : index
    %c2 = arith.constant 2 : index
    %c0_28 = arith.constant 0 : index
    %89 = vector.load %arg12[%c0_27, %c2, %c0_28] : memref<4x8x32xf32, #tpu.memory_space<vmem>>, vector<4x1x32xf32>
    %90 = vector.shape_cast %89 : vector<4x1x32xf32> to vector<4x32xf32>
    %91 = vector.shape_cast %88 : vector<4x32xf32> to vector<4x1x32xf32>
    tpu.vector_store %arg12[%c0_27, %c2, %c0_28], %91 {strides = array<i32>} : memref<4x8x32xf32, #tpu.memory_space<vmem>>, vector<4x1x32xf32>,
    %92 = vector.extract_strided_slice %14 {offsets = [0, 3, 0], sizes = [4, 1, 128], strides = [1, 1, 1]} : vector<4x8x128xf32> to vector<4x1x128xf32>
    %93 = vector.shape_cast %92 : vector<4x1x128xf32> to vector<4x128xf32>
    %cst_29 = arith.constant dense<0.000000e+00> : vector<4x128xf32>
    %94 = tpu.matmul %88, %9, %cst_29 {dimension_numbers = #tpu.dot_dimension_numbers<[1], [0], [0], [1], [0, 0, 1, 1], [], []>} : vector<4x32xf32>, vector<32x128xf32>, vector<4x128xf32> -> vector<4x128xf32>
    %95 = arith.addf %93, %94 : vector<4x128xf32>
    %cst_30 = arith.constant 5.000000e-01 : f32
    %96 = vector.broadcast %cst_30 : f32 to vector<4x128xf32>
    %97 = arith.mulf %96, %95 : vector<4x128xf32>
    %98 = arith.select %5, %95, %97 : vector<4x128xi1>, vector<4x128xf32>
    %99 = math.tanh %98 : vector<4x128xf32>
    %cst_31 = arith.constant 5.000000e-01 : f32
    %100 = vector.broadcast %cst_31 : f32 to vector<4x128xf32>
    %101 = arith.mulf %100, %99 : vector<4x128xf32>
    %cst_32 = arith.constant 5.000000e-01 : f32
    %102 = vector.broadcast %cst_32 : f32 to vector<4x128xf32>
    %103 = arith.addf %101, %102 : vector<4x128xf32>
    %104 = arith.select %5, %99, %103 : vector<4x128xi1>, vector<4x128xf32>
    %105 = vector.extract_strided_slice %104 {offsets = [0, 0], sizes = [4, 32], strides = [1, 1]} : vector<4x128xf32> to vector<4x32xf32>
    %106 = vector.extract_strided_slice %104 {offsets = [0, 32], sizes = [4, 32], strides = [1, 1]} : vector<4x128xf32> to vector<4x32xf32>
    %107 = vector.extract_strided_slice %104 {offsets = [0, 64], sizes = [4, 32], strides = [1, 1]} : vector<4x128xf32> to vector<4x32xf32>
    %108 = vector.extract_strided_slice %104 {offsets = [0, 96], sizes = [4, 32], strides = [1, 1]} : vector<4x128xf32> to vector<4x32xf32>
    %109 = arith.mulf %106, %86 : vector<4x32xf32>
    %110 = arith.mulf %105, %107 : vector<4x32xf32>
    %111 = arith.addf %109, %110 : vector<4x32xf32>
    %112 = math.tanh %111 : vector<4x32xf32>
    %113 = arith.mulf %108, %112 : vector<4x32xf32>
    %c0_33 = arith.constant 0 : index
    %c3 = arith.constant 3 : index
    %c0_34 = arith.constant 0 : index
    %114 = vector.load %arg12[%c0_33, %c3, %c0_34] : memref<4x8x32xf32, #tpu.memory_space<vmem>>, vector<4x1x32xf32>
    %115 = vector.shape_cast %114 : vector<4x1x32xf32> to vector<4x32xf32>
    %116 = vector.shape_cast %113 : vector<4x32xf32> to vector<4x1x32xf32>
    tpu.vector_store %arg12[%c0_33, %c3, %c0_34], %116 {strides = array<i32>} : memref<4x8x32xf32, #tpu.memory_space<vmem>>, vector<4x1x32xf32>,
    %117 = vector.extract_strided_slice %14 {offsets = [0, 4, 0], sizes = [4, 1, 128], strides = [1, 1, 1]} : vector<4x8x128xf32> to vector<4x1x128xf32>
    %118 = vector.shape_cast %117 : vector<4x1x128xf32> to vector<4x128xf32>
    %cst_35 = arith.constant dense<0.000000e+00> : vector<4x128xf32>
    %119 = tpu.matmul %113, %9, %cst_35 {dimension_numbers = #tpu.dot_dimension_numbers<[1], [0], [0], [1], [0, 0, 1, 1], [], []>} : vector<4x32xf32>, vector<32x128xf32>, vector<4x128xf32> -> vector<4x128xf32>
    %120 = arith.addf %118, %119 : vector<4x128xf32>
    %cst_36 = arith.constant 5.000000e-01 : f32
    %121 = vector.broadcast %cst_36 : f32 to vector<4x128xf32>
    %122 = arith.mulf %121, %120 : vector<4x128xf32>
    %123 = arith.select %5, %120, %122 : vector<4x128xi1>, vector<4x128xf32>
    %124 = math.tanh %123 : vector<4x128xf32>
    %cst_37 = arith.constant 5.000000e-01 : f32
    %125 = vector.broadcast %cst_37 : f32 to vector<4x128xf32>
    %126 = arith.mulf %125, %124 : vector<4x128xf32>
    %cst_38 = arith.constant 5.000000e-01 : f32
    %127 = vector.broadcast %cst_38 : f32 to vector<4x128xf32>
    %128 = arith.addf %126, %127 : vector<4x128xf32>
    %129 = arith.select %5, %124, %128 : vector<4x128xi1>, vector<4x128xf32>
    %130 = vector.extract_strided_slice %129 {offsets = [0, 0], sizes = [4, 32], strides = [1, 1]} : vector<4x128xf32> to vector<4x32xf32>
    %131 = vector.extract_strided_slice %129 {offsets = [0, 32], sizes = [4, 32], strides = [1, 1]} : vector<4x128xf32> to vector<4x32xf32>
    %132 = vector.extract_strided_slice %129 {offsets = [0, 64], sizes = [4, 32], strides = [1, 1]} : vector<4x128xf32> to vector<4x32xf32>
    %133 = vector.extract_strided_slice %129 {offsets = [0, 96], sizes = [4, 32], strides = [1, 1]} : vector<4x128xf32> to vector<4x32xf32>
    %134 = arith.mulf %131, %111 : vector<4x32xf32>
    %135 = arith.mulf %130, %132 : vector<4x32xf32>
    %136 = arith.addf %134, %135 : vector<4x32xf32>
    %137 = math.tanh %136 : vector<4x32xf32>
    %138 = arith.mulf %133, %137 : vector<4x32xf32>
    %c0_39 = arith.constant 0 : index
    %c4 = arith.constant 4 : index
    %c0_40 = arith.constant 0 : index
    %139 = vector.load %arg12[%c0_39, %c4, %c0_40] : memref<4x8x32xf32, #tpu.memory_space<vmem>>, vector<4x1x32xf32>
    %140 = vector.shape_cast %139 : vector<4x1x32xf32> to vector<4x32xf32>
    %141 = vector.shape_cast %138 : vector<4x32xf32> to vector<4x1x32xf32>
    tpu.vector_store %arg12[%c0_39, %c4, %c0_40], %141 {strides = array<i32>} : memref<4x8x32xf32, #tpu.memory_space<vmem>>, vector<4x1x32xf32>,
    %142 = vector.extract_strided_slice %14 {offsets = [0, 5, 0], sizes = [4, 1, 128], strides = [1, 1, 1]} : vector<4x8x128xf32> to vector<4x1x128xf32>
    %143 = vector.shape_cast %142 : vector<4x1x128xf32> to vector<4x128xf32>
    %cst_41 = arith.constant dense<0.000000e+00> : vector<4x128xf32>
    %144 = tpu.matmul %138, %9, %cst_41 {dimension_numbers = #tpu.dot_dimension_numbers<[1], [0], [0], [1], [0, 0, 1, 1], [], []>} : vector<4x32xf32>, vector<32x128xf32>, vector<4x128xf32> -> vector<4x128xf32>
    %145 = arith.addf %143, %144 : vector<4x128xf32>
    %cst_42 = arith.constant 5.000000e-01 : f32
    %146 = vector.broadcast %cst_42 : f32 to vector<4x128xf32>
    %147 = arith.mulf %146, %145 : vector<4x128xf32>
    %148 = arith.select %5, %145, %147 : vector<4x128xi1>, vector<4x128xf32>
    %149 = math.tanh %148 : vector<4x128xf32>
    %cst_43 = arith.constant 5.000000e-01 : f32
    %150 = vector.broadcast %cst_43 : f32 to vector<4x128xf32>
    %151 = arith.mulf %150, %149 : vector<4x128xf32>
    %cst_44 = arith.constant 5.000000e-01 : f32
    %152 = vector.broadcast %cst_44 : f32 to vector<4x128xf32>
    %153 = arith.addf %151, %152 : vector<4x128xf32>
    %154 = arith.select %5, %149, %153 : vector<4x128xi1>, vector<4x128xf32>
    %155 = vector.extract_strided_slice %154 {offsets = [0, 0], sizes = [4, 32], strides = [1, 1]} : vector<4x128xf32> to vector<4x32xf32>
    %156 = vector.extract_strided_slice %154 {offsets = [0, 32], sizes = [4, 32], strides = [1, 1]} : vector<4x128xf32> to vector<4x32xf32>
    %157 = vector.extract_strided_slice %154 {offsets = [0, 64], sizes = [4, 32], strides = [1, 1]} : vector<4x128xf32> to vector<4x32xf32>
    %158 = vector.extract_strided_slice %154 {offsets = [0, 96], sizes = [4, 32], strides = [1, 1]} : vector<4x128xf32> to vector<4x32xf32>
    %159 = arith.mulf %156, %136 : vector<4x32xf32>
    %160 = arith.mulf %155, %157 : vector<4x32xf32>
    %161 = arith.addf %159, %160 : vector<4x32xf32>
    %162 = math.tanh %161 : vector<4x32xf32>
    %163 = arith.mulf %158, %162 : vector<4x32xf32>
    %c0_45 = arith.constant 0 : index
    %c5 = arith.constant 5 : index
    %c0_46 = arith.constant 0 : index
    %164 = vector.load %arg12[%c0_45, %c5, %c0_46] : memref<4x8x32xf32, #tpu.memory_space<vmem>>, vector<4x1x32xf32>
    %165 = vector.shape_cast %164 : vector<4x1x32xf32> to vector<4x32xf32>
    %166 = vector.shape_cast %163 : vector<4x32xf32> to vector<4x1x32xf32>
    tpu.vector_store %arg12[%c0_45, %c5, %c0_46], %166 {strides = array<i32>} : memref<4x8x32xf32, #tpu.memory_space<vmem>>, vector<4x1x32xf32>,
    %167 = vector.extract_strided_slice %14 {offsets = [0, 6, 0], sizes = [4, 1, 128], strides = [1, 1, 1]} : vector<4x8x128xf32> to vector<4x1x128xf32>
    %168 = vector.shape_cast %167 : vector<4x1x128xf32> to vector<4x128xf32>
    %cst_47 = arith.constant dense<0.000000e+00> : vector<4x128xf32>
    %169 = tpu.matmul %163, %9, %cst_47 {dimension_numbers = #tpu.dot_dimension_numbers<[1], [0], [0], [1], [0, 0, 1, 1], [], []>} : vector<4x32xf32>, vector<32x128xf32>, vector<4x128xf32> -> vector<4x128xf32>
    %170 = arith.addf %168, %169 : vector<4x128xf32>
    %cst_48 = arith.constant 5.000000e-01 : f32
    %171 = vector.broadcast %cst_48 : f32 to vector<4x128xf32>
    %172 = arith.mulf %171, %170 : vector<4x128xf32>
    %173 = arith.select %5, %170, %172 : vector<4x128xi1>, vector<4x128xf32>
    %174 = math.tanh %173 : vector<4x128xf32>
    %cst_49 = arith.constant 5.000000e-01 : f32
    %175 = vector.broadcast %cst_49 : f32 to vector<4x128xf32>
    %176 = arith.mulf %175, %174 : vector<4x128xf32>
    %cst_50 = arith.constant 5.000000e-01 : f32
    %177 = vector.broadcast %cst_50 : f32 to vector<4x128xf32>
    %178 = arith.addf %176, %177 : vector<4x128xf32>
    %179 = arith.select %5, %174, %178 : vector<4x128xi1>, vector<4x128xf32>
    %180 = vector.extract_strided_slice %179 {offsets = [0, 0], sizes = [4, 32], strides = [1, 1]} : vector<4x128xf32> to vector<4x32xf32>
    %181 = vector.extract_strided_slice %179 {offsets = [0, 32], sizes = [4, 32], strides = [1, 1]} : vector<4x128xf32> to vector<4x32xf32>
    %182 = vector.extract_strided_slice %179 {offsets = [0, 64], sizes = [4, 32], strides = [1, 1]} : vector<4x128xf32> to vector<4x32xf32>
    %183 = vector.extract_strided_slice %179 {offsets = [0, 96], sizes = [4, 32], strides = [1, 1]} : vector<4x128xf32> to vector<4x32xf32>
    %184 = arith.mulf %181, %161 : vector<4x32xf32>
    %185 = arith.mulf %180, %182 : vector<4x32xf32>
    %186 = arith.addf %184, %185 : vector<4x32xf32>
    %187 = math.tanh %186 : vector<4x32xf32>
    %188 = arith.mulf %183, %187 : vector<4x32xf32>
    %c0_51 = arith.constant 0 : index
    %c6 = arith.constant 6 : index
    %c0_52 = arith.constant 0 : index
    %189 = vector.load %arg12[%c0_51, %c6, %c0_52] : memref<4x8x32xf32, #tpu.memory_space<vmem>>, vector<4x1x32xf32>
    %190 = vector.shape_cast %189 : vector<4x1x32xf32> to vector<4x32xf32>
    %191 = vector.shape_cast %188 : vector<4x32xf32> to vector<4x1x32xf32>
    tpu.vector_store %arg12[%c0_51, %c6, %c0_52], %191 {strides = array<i32>} : memref<4x8x32xf32, #tpu.memory_space<vmem>>, vector<4x1x32xf32>,
    %192 = vector.extract_strided_slice %14 {offsets = [0, 7, 0], sizes = [4, 1, 128], strides = [1, 1, 1]} : vector<4x8x128xf32> to vector<4x1x128xf32>
    %193 = vector.shape_cast %192 : vector<4x1x128xf32> to vector<4x128xf32>
    %cst_53 = arith.constant dense<0.000000e+00> : vector<4x128xf32>
    %194 = tpu.matmul %188, %9, %cst_53 {dimension_numbers = #tpu.dot_dimension_numbers<[1], [0], [0], [1], [0, 0, 1, 1], [], []>} : vector<4x32xf32>, vector<32x128xf32>, vector<4x128xf32> -> vector<4x128xf32>
    %195 = arith.addf %193, %194 : vector<4x128xf32>
    %cst_54 = arith.constant 5.000000e-01 : f32
    %196 = vector.broadcast %cst_54 : f32 to vector<4x128xf32>
    %197 = arith.mulf %196, %195 : vector<4x128xf32>
    %198 = arith.select %5, %195, %197 : vector<4x128xi1>, vector<4x128xf32>
    %199 = math.tanh %198 : vector<4x128xf32>
    %cst_55 = arith.constant 5.000000e-01 : f32
    %200 = vector.broadcast %cst_55 : f32 to vector<4x128xf32>
    %201 = arith.mulf %200, %199 : vector<4x128xf32>
    %cst_56 = arith.constant 5.000000e-01 : f32
    %202 = vector.broadcast %cst_56 : f32 to vector<4x128xf32>
    %203 = arith.addf %201, %202 : vector<4x128xf32>
    %204 = arith.select %5, %199, %203 : vector<4x128xi1>, vector<4x128xf32>
    %205 = vector.extract_strided_slice %204 {offsets = [0, 0], sizes = [4, 32], strides = [1, 1]} : vector<4x128xf32> to vector<4x32xf32>
    %206 = vector.extract_strided_slice %204 {offsets = [0, 32], sizes = [4, 32], strides = [1, 1]} : vector<4x128xf32> to vector<4x32xf32>
    %207 = vector.extract_strided_slice %204 {offsets = [0, 64], sizes = [4, 32], strides = [1, 1]} : vector<4x128xf32> to vector<4x32xf32>
    %208 = vector.extract_strided_slice %204 {offsets = [0, 96], sizes = [4, 32], strides = [1, 1]} : vector<4x128xf32> to vector<4x32xf32>
    %209 = arith.mulf %206, %186 : vector<4x32xf32>
    %210 = arith.mulf %205, %207 : vector<4x32xf32>
    %211 = arith.addf %209, %210 : vector<4x32xf32>
    %212 = math.tanh %211 : vector<4x32xf32>
    %213 = arith.mulf %208, %212 : vector<4x32xf32>
    %c0_57 = arith.constant 0 : index
    %c7 = arith.constant 7 : index
    %c0_58 = arith.constant 0 : index
    %214 = vector.load %arg12[%c0_57, %c7, %c0_58] : memref<4x8x32xf32, #tpu.memory_space<vmem>>, vector<4x1x32xf32>
    %215 = vector.shape_cast %214 : vector<4x1x32xf32> to vector<4x32xf32>
    %216 = vector.shape_cast %213 : vector<4x32xf32> to vector<4x1x32xf32>
    tpu.vector_store %arg12[%c0_57, %c7, %c0_58], %216 {strides = array<i32>} : memref<4x8x32xf32, #tpu.memory_space<vmem>>, vector<4x1x32xf32>,
    %c0_59 = arith.constant 0 : index
    %c0_60 = arith.constant 0 : index
    %c0_61 = arith.constant 0 : index
    %217 = vector.load %arg12[%c0_59, %c0_60, %c0_61] : memref<4x8x32xf32, #tpu.memory_space<vmem>>, vector<4x8x32xf32>
    %218 = vector.shape_cast %217 : vector<4x8x32xf32> to vector<32x32xf32>
    %c0_62 = arith.constant 0 : index
    %c0_63 = arith.constant 0 : index
    %219 = vector.load %arg4[%c0_62, %c0_63] : memref<32x128xf32, #tpu.memory_space<vmem>>, vector<32x128xf32>
    %c0_64 = arith.constant 0 : index
    %c0_65 = arith.constant 0 : index
    %220 = vector.load %arg5[%c0_64, %c0_65] : memref<32x128xf32, #tpu.memory_space<vmem>>, vector<32x128xf32>
    %c0_66 = arith.constant 0 : index
    %c0_67 = arith.constant 0 : index
    %221 = vector.load %arg6[%c0_66, %c0_67] : memref<1x128xf32, #tpu.memory_space<vmem>>, vector<1x128xf32>
    %cst_68 = arith.constant dense<0.000000e+00> : vector<32x128xf32>
    %222 = tpu.matmul %218, %219, %cst_68 {dimension_numbers = #tpu.dot_dimension_numbers<[1], [0], [0], [1], [0, 0, 1, 1], [], []>} : vector<32x32xf32>, vector<32x128xf32>, vector<32x128xf32> -> vector<32x128xf32>
    %223 = vector.broadcast %221 : vector<1x128xf32> to vector<32x128xf32>
    %224 = arith.addf %222, %223 : vector<32x128xf32>
    %225 = vector.shape_cast %224 : vector<32x128xf32> to vector<4x8x128xf32>
    %cst_69 = arith.constant 0.000000e+00 : f32
    %226 = vector.broadcast %cst_69 : f32 to vector<4x32xf32>
    %cst_70 = arith.constant 0.000000e+00 : f32
    %227 = vector.broadcast %cst_70 : f32 to vector<4x32xf32>
    %228 = vector.extract_strided_slice %225 {offsets = [0, 0, 0], sizes = [4, 1, 128], strides = [1, 1, 1]} : vector<4x8x128xf32> to vector<4x1x128xf32>
    %229 = vector.shape_cast %228 : vector<4x1x128xf32> to vector<4x128xf32>
    %cst_71 = arith.constant dense<0.000000e+00> : vector<4x128xf32>
    %230 = tpu.matmul %226, %220, %cst_71 {dimension_numbers = #tpu.dot_dimension_numbers<[1], [0], [0], [1], [0, 0, 1, 1], [], []>} : vector<4x32xf32>, vector<32x128xf32>, vector<4x128xf32> -> vector<4x128xf32>
    %231 = arith.addf %229, %230 : vector<4x128xf32>
    %cst_72 = arith.constant 5.000000e-01 : f32
    %232 = vector.broadcast %cst_72 : f32 to vector<4x128xf32>
    %233 = arith.mulf %232, %231 : vector<4x128xf32>
    %234 = arith.select %5, %231, %233 : vector<4x128xi1>, vector<4x128xf32>
    %235 = math.tanh %234 : vector<4x128xf32>
    %cst_73 = arith.constant 5.000000e-01 : f32
    %236 = vector.broadcast %cst_73 : f32 to vector<4x128xf32>
    %237 = arith.mulf %236, %235 : vector<4x128xf32>
    %cst_74 = arith.constant 5.000000e-01 : f32
    %238 = vector.broadcast %cst_74 : f32 to vector<4x128xf32>
    %239 = arith.addf %237, %238 : vector<4x128xf32>
    %240 = arith.select %5, %235, %239 : vector<4x128xi1>, vector<4x128xf32>
    %241 = vector.extract_strided_slice %240 {offsets = [0, 0], sizes = [4, 32], strides = [1, 1]} : vector<4x128xf32> to vector<4x32xf32>
    %242 = vector.extract_strided_slice %240 {offsets = [0, 32], sizes = [4, 32], strides = [1, 1]} : vector<4x128xf32> to vector<4x32xf32>
    %243 = vector.extract_strided_slice %240 {offsets = [0, 64], sizes = [4, 32], strides = [1, 1]} : vector<4x128xf32> to vector<4x32xf32>
    %244 = vector.extract_strided_slice %240 {offsets = [0, 96], sizes = [4, 32], strides = [1, 1]} : vector<4x128xf32> to vector<4x32xf32>
    %245 = arith.mulf %242, %227 : vector<4x32xf32>
    %246 = arith.mulf %241, %243 : vector<4x32xf32>
    %247 = arith.addf %245, %246 : vector<4x32xf32>
    %248 = math.tanh %247 : vector<4x32xf32>
    %249 = arith.mulf %244, %248 : vector<4x32xf32>
    %250 = vector.extract_strided_slice %225 {offsets = [0, 1, 0], sizes = [4, 1, 128], strides = [1, 1, 1]} : vector<4x8x128xf32> to vector<4x1x128xf32>
    %251 = vector.shape_cast %250 : vector<4x1x128xf32> to vector<4x128xf32>
    %cst_75 = arith.constant dense<0.000000e+00> : vector<4x128xf32>
    %252 = tpu.matmul %249, %220, %cst_75 {dimension_numbers = #tpu.dot_dimension_numbers<[1], [0], [0], [1], [0, 0, 1, 1], [], []>} : vector<4x32xf32>, vector<32x128xf32>, vector<4x128xf32> -> vector<4x128xf32>
    %253 = arith.addf %251, %252 : vector<4x128xf32>
    %cst_76 = arith.constant 5.000000e-01 : f32
    %254 = vector.broadcast %cst_76 : f32 to vector<4x128xf32>
    %255 = arith.mulf %254, %253 : vector<4x128xf32>
    %256 = arith.select %5, %253, %255 : vector<4x128xi1>, vector<4x128xf32>
    %257 = math.tanh %256 : vector<4x128xf32>
    %cst_77 = arith.constant 5.000000e-01 : f32
    %258 = vector.broadcast %cst_77 : f32 to vector<4x128xf32>
    %259 = arith.mulf %258, %257 : vector<4x128xf32>
    %cst_78 = arith.constant 5.000000e-01 : f32
    %260 = vector.broadcast %cst_78 : f32 to vector<4x128xf32>
    %261 = arith.addf %259, %260 : vector<4x128xf32>
    %262 = arith.select %5, %257, %261 : vector<4x128xi1>, vector<4x128xf32>
    %263 = vector.extract_strided_slice %262 {offsets = [0, 0], sizes = [4, 32], strides = [1, 1]} : vector<4x128xf32> to vector<4x32xf32>
    %264 = vector.extract_strided_slice %262 {offsets = [0, 32], sizes = [4, 32], strides = [1, 1]} : vector<4x128xf32> to vector<4x32xf32>
    %265 = vector.extract_strided_slice %262 {offsets = [0, 64], sizes = [4, 32], strides = [1, 1]} : vector<4x128xf32> to vector<4x32xf32>
    %266 = vector.extract_strided_slice %262 {offsets = [0, 96], sizes = [4, 32], strides = [1, 1]} : vector<4x128xf32> to vector<4x32xf32>
    %267 = arith.mulf %264, %247 : vector<4x32xf32>
    %268 = arith.mulf %263, %265 : vector<4x32xf32>
    %269 = arith.addf %267, %268 : vector<4x32xf32>
    %270 = math.tanh %269 : vector<4x32xf32>
    %271 = arith.mulf %266, %270 : vector<4x32xf32>
    %272 = vector.extract_strided_slice %225 {offsets = [0, 2, 0], sizes = [4, 1, 128], strides = [1, 1, 1]} : vector<4x8x128xf32> to vector<4x1x128xf32>
    %273 = vector.shape_cast %272 : vector<4x1x128xf32> to vector<4x128xf32>
    %cst_79 = arith.constant dense<0.000000e+00> : vector<4x128xf32>
    %274 = tpu.matmul %271, %220, %cst_79 {dimension_numbers = #tpu.dot_dimension_numbers<[1], [0], [0], [1], [0, 0, 1, 1], [], []>} : vector<4x32xf32>, vector<32x128xf32>, vector<4x128xf32> -> vector<4x128xf32>
    %275 = arith.addf %273, %274 : vector<4x128xf32>
    %cst_80 = arith.constant 5.000000e-01 : f32
    %276 = vector.broadcast %cst_80 : f32 to vector<4x128xf32>
    %277 = arith.mulf %276, %275 : vector<4x128xf32>
    %278 = arith.select %5, %275, %277 : vector<4x128xi1>, vector<4x128xf32>
    %279 = math.tanh %278 : vector<4x128xf32>
    %cst_81 = arith.constant 5.000000e-01 : f32
    %280 = vector.broadcast %cst_81 : f32 to vector<4x128xf32>
    %281 = arith.mulf %280, %279 : vector<4x128xf32>
    %cst_82 = arith.constant 5.000000e-01 : f32
    %282 = vector.broadcast %cst_82 : f32 to vector<4x128xf32>
    %283 = arith.addf %281, %282 : vector<4x128xf32>
    %284 = arith.select %5, %279, %283 : vector<4x128xi1>, vector<4x128xf32>
    %285 = vector.extract_strided_slice %284 {offsets = [0, 0], sizes = [4, 32], strides = [1, 1]} : vector<4x128xf32> to vector<4x32xf32>
    %286 = vector.extract_strided_slice %284 {offsets = [0, 32], sizes = [4, 32], strides = [1, 1]} : vector<4x128xf32> to vector<4x32xf32>
    %287 = vector.extract_strided_slice %284 {offsets = [0, 64], sizes = [4, 32], strides = [1, 1]} : vector<4x128xf32> to vector<4x32xf32>
    %288 = vector.extract_strided_slice %284 {offsets = [0, 96], sizes = [4, 32], strides = [1, 1]} : vector<4x128xf32> to vector<4x32xf32>
    %289 = arith.mulf %286, %269 : vector<4x32xf32>
    %290 = arith.mulf %285, %287 : vector<4x32xf32>
    %291 = arith.addf %289, %290 : vector<4x32xf32>
    %292 = math.tanh %291 : vector<4x32xf32>
    %293 = arith.mulf %288, %292 : vector<4x32xf32>
    %294 = vector.extract_strided_slice %225 {offsets = [0, 3, 0], sizes = [4, 1, 128], strides = [1, 1, 1]} : vector<4x8x128xf32> to vector<4x1x128xf32>
    %295 = vector.shape_cast %294 : vector<4x1x128xf32> to vector<4x128xf32>
    %cst_83 = arith.constant dense<0.000000e+00> : vector<4x128xf32>
    %296 = tpu.matmul %293, %220, %cst_83 {dimension_numbers = #tpu.dot_dimension_numbers<[1], [0], [0], [1], [0, 0, 1, 1], [], []>} : vector<4x32xf32>, vector<32x128xf32>, vector<4x128xf32> -> vector<4x128xf32>
    %297 = arith.addf %295, %296 : vector<4x128xf32>
    %cst_84 = arith.constant 5.000000e-01 : f32
    %298 = vector.broadcast %cst_84 : f32 to vector<4x128xf32>
    %299 = arith.mulf %298, %297 : vector<4x128xf32>
    %300 = arith.select %5, %297, %299 : vector<4x128xi1>, vector<4x128xf32>
    %301 = math.tanh %300 : vector<4x128xf32>
    %cst_85 = arith.constant 5.000000e-01 : f32
    %302 = vector.broadcast %cst_85 : f32 to vector<4x128xf32>
    %303 = arith.mulf %302, %301 : vector<4x128xf32>
    %cst_86 = arith.constant 5.000000e-01 : f32
    %304 = vector.broadcast %cst_86 : f32 to vector<4x128xf32>
    %305 = arith.addf %303, %304 : vector<4x128xf32>
    %306 = arith.select %5, %301, %305 : vector<4x128xi1>, vector<4x128xf32>
    %307 = vector.extract_strided_slice %306 {offsets = [0, 0], sizes = [4, 32], strides = [1, 1]} : vector<4x128xf32> to vector<4x32xf32>
    %308 = vector.extract_strided_slice %306 {offsets = [0, 32], sizes = [4, 32], strides = [1, 1]} : vector<4x128xf32> to vector<4x32xf32>
    %309 = vector.extract_strided_slice %306 {offsets = [0, 64], sizes = [4, 32], strides = [1, 1]} : vector<4x128xf32> to vector<4x32xf32>
    %310 = vector.extract_strided_slice %306 {offsets = [0, 96], sizes = [4, 32], strides = [1, 1]} : vector<4x128xf32> to vector<4x32xf32>
    %311 = arith.mulf %308, %291 : vector<4x32xf32>
    %312 = arith.mulf %307, %309 : vector<4x32xf32>
    %313 = arith.addf %311, %312 : vector<4x32xf32>
    %314 = math.tanh %313 : vector<4x32xf32>
    %315 = arith.mulf %310, %314 : vector<4x32xf32>
    %316 = vector.extract_strided_slice %225 {offsets = [0, 4, 0], sizes = [4, 1, 128], strides = [1, 1, 1]} : vector<4x8x128xf32> to vector<4x1x128xf32>
    %317 = vector.shape_cast %316 : vector<4x1x128xf32> to vector<4x128xf32>
    %cst_87 = arith.constant dense<0.000000e+00> : vector<4x128xf32>
    %318 = tpu.matmul %315, %220, %cst_87 {dimension_numbers = #tpu.dot_dimension_numbers<[1], [0], [0], [1], [0, 0, 1, 1], [], []>} : vector<4x32xf32>, vector<32x128xf32>, vector<4x128xf32> -> vector<4x128xf32>
    %319 = arith.addf %317, %318 : vector<4x128xf32>
    %cst_88 = arith.constant 5.000000e-01 : f32
    %320 = vector.broadcast %cst_88 : f32 to vector<4x128xf32>
    %321 = arith.mulf %320, %319 : vector<4x128xf32>
    %322 = arith.select %5, %319, %321 : vector<4x128xi1>, vector<4x128xf32>
    %323 = math.tanh %322 : vector<4x128xf32>
    %cst_89 = arith.constant 5.000000e-01 : f32
    %324 = vector.broadcast %cst_89 : f32 to vector<4x128xf32>
    %325 = arith.mulf %324, %323 : vector<4x128xf32>
    %cst_90 = arith.constant 5.000000e-01 : f32
    %326 = vector.broadcast %cst_90 : f32 to vector<4x128xf32>
    %327 = arith.addf %325, %326 : vector<4x128xf32>
    %328 = arith.select %5, %323, %327 : vector<4x128xi1>, vector<4x128xf32>
    %329 = vector.extract_strided_slice %328 {offsets = [0, 0], sizes = [4, 32], strides = [1, 1]} : vector<4x128xf32> to vector<4x32xf32>
    %330 = vector.extract_strided_slice %328 {offsets = [0, 32], sizes = [4, 32], strides = [1, 1]} : vector<4x128xf32> to vector<4x32xf32>
    %331 = vector.extract_strided_slice %328 {offsets = [0, 64], sizes = [4, 32], strides = [1, 1]} : vector<4x128xf32> to vector<4x32xf32>
    %332 = vector.extract_strided_slice %328 {offsets = [0, 96], sizes = [4, 32], strides = [1, 1]} : vector<4x128xf32> to vector<4x32xf32>
    %333 = arith.mulf %330, %313 : vector<4x32xf32>
    %334 = arith.mulf %329, %331 : vector<4x32xf32>
    %335 = arith.addf %333, %334 : vector<4x32xf32>
    %336 = math.tanh %335 : vector<4x32xf32>
    %337 = arith.mulf %332, %336 : vector<4x32xf32>
    %338 = vector.extract_strided_slice %225 {offsets = [0, 5, 0], sizes = [4, 1, 128], strides = [1, 1, 1]} : vector<4x8x128xf32> to vector<4x1x128xf32>
    %339 = vector.shape_cast %338 : vector<4x1x128xf32> to vector<4x128xf32>
    %cst_91 = arith.constant dense<0.000000e+00> : vector<4x128xf32>
    %340 = tpu.matmul %337, %220, %cst_91 {dimension_numbers = #tpu.dot_dimension_numbers<[1], [0], [0], [1], [0, 0, 1, 1], [], []>} : vector<4x32xf32>, vector<32x128xf32>, vector<4x128xf32> -> vector<4x128xf32>
    %341 = arith.addf %339, %340 : vector<4x128xf32>
    %cst_92 = arith.constant 5.000000e-01 : f32
    %342 = vector.broadcast %cst_92 : f32 to vector<4x128xf32>
    %343 = arith.mulf %342, %341 : vector<4x128xf32>
    %344 = arith.select %5, %341, %343 : vector<4x128xi1>, vector<4x128xf32>
    %345 = math.tanh %344 : vector<4x128xf32>
    %cst_93 = arith.constant 5.000000e-01 : f32
    %346 = vector.broadcast %cst_93 : f32 to vector<4x128xf32>
    %347 = arith.mulf %346, %345 : vector<4x128xf32>
    %cst_94 = arith.constant 5.000000e-01 : f32
    %348 = vector.broadcast %cst_94 : f32 to vector<4x128xf32>
    %349 = arith.addf %347, %348 : vector<4x128xf32>
    %350 = arith.select %5, %345, %349 : vector<4x128xi1>, vector<4x128xf32>
    %351 = vector.extract_strided_slice %350 {offsets = [0, 0], sizes = [4, 32], strides = [1, 1]} : vector<4x128xf32> to vector<4x32xf32>
    %352 = vector.extract_strided_slice %350 {offsets = [0, 32], sizes = [4, 32], strides = [1, 1]} : vector<4x128xf32> to vector<4x32xf32>
    %353 = vector.extract_strided_slice %350 {offsets = [0, 64], sizes = [4, 32], strides = [1, 1]} : vector<4x128xf32> to vector<4x32xf32>
    %354 = vector.extract_strided_slice %350 {offsets = [0, 96], sizes = [4, 32], strides = [1, 1]} : vector<4x128xf32> to vector<4x32xf32>
    %355 = arith.mulf %352, %335 : vector<4x32xf32>
    %356 = arith.mulf %351, %353 : vector<4x32xf32>
    %357 = arith.addf %355, %356 : vector<4x32xf32>
    %358 = math.tanh %357 : vector<4x32xf32>
    %359 = arith.mulf %354, %358 : vector<4x32xf32>
    %360 = vector.extract_strided_slice %225 {offsets = [0, 6, 0], sizes = [4, 1, 128], strides = [1, 1, 1]} : vector<4x8x128xf32> to vector<4x1x128xf32>
    %361 = vector.shape_cast %360 : vector<4x1x128xf32> to vector<4x128xf32>
    %cst_95 = arith.constant dense<0.000000e+00> : vector<4x128xf32>
    %362 = tpu.matmul %359, %220, %cst_95 {dimension_numbers = #tpu.dot_dimension_numbers<[1], [0], [0], [1], [0, 0, 1, 1], [], []>} : vector<4x32xf32>, vector<32x128xf32>, vector<4x128xf32> -> vector<4x128xf32>
    %363 = arith.addf %361, %362 : vector<4x128xf32>
    %cst_96 = arith.constant 5.000000e-01 : f32
    %364 = vector.broadcast %cst_96 : f32 to vector<4x128xf32>
    %365 = arith.mulf %364, %363 : vector<4x128xf32>
    %366 = arith.select %5, %363, %365 : vector<4x128xi1>, vector<4x128xf32>
    %367 = math.tanh %366 : vector<4x128xf32>
    %cst_97 = arith.constant 5.000000e-01 : f32
    %368 = vector.broadcast %cst_97 : f32 to vector<4x128xf32>
    %369 = arith.mulf %368, %367 : vector<4x128xf32>
    %cst_98 = arith.constant 5.000000e-01 : f32
    %370 = vector.broadcast %cst_98 : f32 to vector<4x128xf32>
    %371 = arith.addf %369, %370 : vector<4x128xf32>
    %372 = arith.select %5, %367, %371 : vector<4x128xi1>, vector<4x128xf32>
    %373 = vector.extract_strided_slice %372 {offsets = [0, 0], sizes = [4, 32], strides = [1, 1]} : vector<4x128xf32> to vector<4x32xf32>
    %374 = vector.extract_strided_slice %372 {offsets = [0, 32], sizes = [4, 32], strides = [1, 1]} : vector<4x128xf32> to vector<4x32xf32>
    %375 = vector.extract_strided_slice %372 {offsets = [0, 64], sizes = [4, 32], strides = [1, 1]} : vector<4x128xf32> to vector<4x32xf32>
    %376 = vector.extract_strided_slice %372 {offsets = [0, 96], sizes = [4, 32], strides = [1, 1]} : vector<4x128xf32> to vector<4x32xf32>
    %377 = arith.mulf %374, %357 : vector<4x32xf32>
    %378 = arith.mulf %373, %375 : vector<4x32xf32>
    %379 = arith.addf %377, %378 : vector<4x32xf32>
    %380 = math.tanh %379 : vector<4x32xf32>
    %381 = arith.mulf %376, %380 : vector<4x32xf32>
    %382 = vector.extract_strided_slice %225 {offsets = [0, 7, 0], sizes = [4, 1, 128], strides = [1, 1, 1]} : vector<4x8x128xf32> to vector<4x1x128xf32>
    %383 = vector.shape_cast %382 : vector<4x1x128xf32> to vector<4x128xf32>
    %cst_99 = arith.constant dense<0.000000e+00> : vector<4x128xf32>
    %384 = tpu.matmul %381, %220, %cst_99 {dimension_numbers = #tpu.dot_dimension_numbers<[1], [0], [0], [1], [0, 0, 1, 1], [], []>} : vector<4x32xf32>, vector<32x128xf32>, vector<4x128xf32> -> vector<4x128xf32>
    %385 = arith.addf %383, %384 : vector<4x128xf32>
    %cst_100 = arith.constant 5.000000e-01 : f32
    %386 = vector.broadcast %cst_100 : f32 to vector<4x128xf32>
    %387 = arith.mulf %386, %385 : vector<4x128xf32>
    %388 = arith.select %5, %385, %387 : vector<4x128xi1>, vector<4x128xf32>
    %389 = math.tanh %388 : vector<4x128xf32>
    %cst_101 = arith.constant 5.000000e-01 : f32
    %390 = vector.broadcast %cst_101 : f32 to vector<4x128xf32>
    %391 = arith.mulf %390, %389 : vector<4x128xf32>
    %cst_102 = arith.constant 5.000000e-01 : f32
    %392 = vector.broadcast %cst_102 : f32 to vector<4x128xf32>
    %393 = arith.addf %391, %392 : vector<4x128xf32>
    %394 = arith.select %5, %389, %393 : vector<4x128xi1>, vector<4x128xf32>
    %395 = vector.extract_strided_slice %394 {offsets = [0, 0], sizes = [4, 32], strides = [1, 1]} : vector<4x128xf32> to vector<4x32xf32>
    %396 = vector.extract_strided_slice %394 {offsets = [0, 32], sizes = [4, 32], strides = [1, 1]} : vector<4x128xf32> to vector<4x32xf32>
    %397 = vector.extract_strided_slice %394 {offsets = [0, 64], sizes = [4, 32], strides = [1, 1]} : vector<4x128xf32> to vector<4x32xf32>
    %398 = vector.extract_strided_slice %394 {offsets = [0, 96], sizes = [4, 32], strides = [1, 1]} : vector<4x128xf32> to vector<4x32xf32>
    %399 = arith.mulf %396, %379 : vector<4x32xf32>
    %400 = arith.mulf %395, %397 : vector<4x32xf32>
    %401 = arith.addf %399, %400 : vector<4x32xf32>
    %402 = math.tanh %401 : vector<4x32xf32>
    %403 = arith.mulf %398, %402 : vector<4x32xf32>
    %404 = tpu.concatenate %213, %403 in 0 : vector<4x32xf32>, vector<4x32xf32> -> vector<8x32xf32>
    %cst_103 = arith.constant 0.000000e+00 : f32
    %405 = vector.broadcast %cst_103 : f32 to vector<8x32xf32>
    %406 = arith.maximumf %404, %405 : vector<8x32xf32>
    %c0_104 = arith.constant 0 : index
    %c0_105 = arith.constant 0 : index
    %407 = vector.load %arg7[%c0_104, %c0_105] : memref<32x128xf32, #tpu.memory_space<vmem>>, vector<32x128xf32>
    %cst_106 = arith.constant dense<0.000000e+00> : vector<8x128xf32>
    %408 = tpu.matmul %406, %407, %cst_106 {dimension_numbers = #tpu.dot_dimension_numbers<[1], [0], [0], [1], [0, 0, 1, 1], [], []>} : vector<8x32xf32>, vector<32x128xf32>, vector<8x128xf32> -> vector<8x128xf32>
    %c0_107 = arith.constant 0 : index
    %c0_108 = arith.constant 0 : index
    %409 = vector.load %arg8[%c0_107, %c0_108] : memref<1x128xf32, #tpu.memory_space<vmem>>, vector<1x128xf32>
    %410 = vector.broadcast %409 : vector<1x128xf32> to vector<8x128xf32>
    %411 = arith.addf %408, %410 : vector<8x128xf32>
    %cst_109 = arith.constant 0.000000e+00 : f32
    %412 = vector.broadcast %cst_109 : f32 to vector<8x128xf32>
    %413 = arith.maximumf %411, %412 : vector<8x128xf32>
    %c0_110 = arith.constant 0 : index
    %c0_111 = arith.constant 0 : index
    %414 = vector.load %arg9[%c0_110, %c0_111] : memref<128x8xf32, #tpu.memory_space<vmem>>, vector<128x8xf32>
    %cst_112 = arith.constant dense<0.000000e+00> : vector<8x8xf32>
    %415 = tpu.matmul %413, %414, %cst_112 {dimension_numbers = #tpu.dot_dimension_numbers<[1], [0], [0], [1], [0, 0, 1, 1], [], []>} : vector<8x128xf32>, vector<128x8xf32>, vector<8x8xf32> -> vector<8x8xf32>
    %c0_113 = arith.constant 0 : index
    %c0_114 = arith.constant 0 : index
    %416 = vector.load %arg10[%c0_113, %c0_114] : memref<1x8xf32, #tpu.memory_space<vmem>>, vector<1x8xf32>
    %417 = vector.broadcast %416 : vector<1x8xf32> to vector<8x8xf32>
    %418 = arith.addf %415, %417 : vector<8x8xf32>
    %c0_115 = arith.constant 0 : index
    %c0_116 = arith.constant 0 : index
    %419 = vector.load %arg11[%c0_115, %c0_116] : memref<8x8xf32, #tpu.memory_space<vmem>>, vector<8x8xf32>
    tpu.vector_store %arg11[%c0_115, %c0_116], %418 {strides = array<i32>} : memref<8x8xf32, #tpu.memory_space<vmem>>, vector<8x8xf32>,
    return
  }
}

</mosaic_0001>

<llo_original>
// kernel: lstm_forward.1
$region0: #{lstm_forward.1}
  #allocation0 [shape = 'u32[]', space=smem, size = 0x4, offset = 0x4, fixed_abs, tag = 'smem constant byte address 0x4 - core index']
  #allocation1 [shape = 'u32[72,128]{1,0:T(1,128)}', space=vmem, size = 0x9000, scoped, tag = 'internal scratch']
  #allocation2 [shape = 'f32[4,8,32]{2,1,0:T(8,128)}', space=vmem, size = 0x4000, scoped, tag = 'scratch operand']
  %s0 = inlined_call_operand.vmem [shape: f32[4,8,16], index: 0, kind: input, shape index: {}]
  %s1 = inlined_call_operand.hbm [shape: f32[16,128], index: 1, kind: input, shape index: {}]
  %s2 = inlined_call_operand.vmem [shape: f32[32,128], index: 2, kind: input, shape index: {}]
  %s3 = inlined_call_operand.vmem [shape: f32[1,128], index: 3, kind: input, shape index: {}]
  %s4 = inlined_call_operand.vmem [shape: f32[32,128], index: 4, kind: input, shape index: {}]
  %s5 = inlined_call_operand.vmem [shape: f32[32,128], index: 5, kind: input, shape index: {}]
  %s6 = inlined_call_operand.vmem [shape: f32[1,128], index: 6, kind: input, shape index: {}]
  %s7 = inlined_call_operand.hbm [shape: f32[32,128], index: 7, kind: input, shape index: {}]
  %s8 = inlined_call_operand.vmem [shape: f32[1,128], index: 8, kind: input, shape index: {}]
  %s9 = inlined_call_operand.vmem [shape: f32[128,8], index: 9, kind: input, shape index: {}]
  %s10 = inlined_call_operand.vmem [shape: f32[1,8], index: 10, kind: input, shape index: {}]
  %s11 = inlined_call_operand.hbm [shape: f32[8,8], index: 11, kind: output, shape index: {}]
  %s12 = sld [smem:[#allocation0]]
  $region62: #{lstm_forward.1} parent=0
    _
  %s14 = ssub.s32 1, %s12
  %s15 = scalar_select 0, %s14, %s12
  $region1: #{lstm_forward.1} parent=0
    #allocation3 [shape = 'u8[8192]{0}', space=vmem, size = 0x2000, scoped, tag = 'input window, operand 1, single buffered']
    #allocation4 [shape = 's32[1]{0}', space=sflag, size = 0x4, scoped, tag = 'scoped memory for lstm_forward.1']
    #allocation5 [shape = 's32[1]{0}', space=sflag, size = 0x4, scoped, tag = 'scoped memory for lstm_forward.1']
    #allocation6 [shape = 'u8[16384]{0}', space=vmem, size = 0x4000, scoped, tag = 'input window, operand 7, single buffered']
    #allocation7 [shape = 's32[1]{0}', space=sflag, size = 0x4, scoped, tag = 'scoped memory for lstm_forward.1']
    #allocation8 [shape = 'u8[4096]{0}', space=vmem, size = 0x1000, scoped, tag = 'output window, operand 0, single buffered']
    %16 = vsyncpa [#allocation4], 0
    %17 = vsyncpa [#allocation7], 0
    %18 = vsyncpa [#allocation5], 0
    // Predicated region
    $region2: #{lstm_forward.1} parent=1 // pred_check
      _
    $region3: #{lstm_forward.1} parent=1 // pred_check_branch
      %20 = sbr.rel (0) target = $region5
    $region4: #{lstm_forward.1} parent=1 // pred_region
      _
    $region5: #{lstm_forward.1} parent=1 // pred_fallthru
      _
    // Predicated region
    $region6: #{lstm_forward.1} parent=1 // pred_check
      _
    $region7: #{lstm_forward.1} parent=1 // pred_check_branch
      %22 = sbr.rel (0) target = $region9
    $region8: #{lstm_forward.1} parent=1 // pred_region
      %24 = vsyncadd [#allocation4], 0
      %s25 = sshll.u32 %s1, 4
      %s26 = int_to_ptr.hbm [resolvable:$true] %s25
      %s27 = sshll.u32 [#allocation3], 4
      %s28 = int_to_ptr.vmem [resolvable:$true] %s27
      %33 = dma.hbm_to_vmem [thread:$0]  %s26, 256, %s28, [#allocation4], 128, 128, 8
    $region9: #{lstm_forward.1} parent=1 // pred_fallthru
      _
    // Predicated region
    $region10: #{lstm_forward.1} parent=1 // pred_check
      _
    $region11: #{lstm_forward.1} parent=1 // pred_check_branch
      %35 = sbr.rel (0) target = $region13
    $region12: #{lstm_forward.1} parent=1 // pred_region
      _
    $region13: #{lstm_forward.1} parent=1 // pred_fallthru
      _
    // Predicated region
    $region14: #{lstm_forward.1} parent=1 // pred_check
      _
    $region15: #{lstm_forward.1} parent=1 // pred_check_branch
      %37 = sbr.rel (0) target = $region17
    $region16: #{lstm_forward.1} parent=1 // pred_region
      _
    $region17: #{lstm_forward.1} parent=1 // pred_fallthru
      _
    // Predicated region
    $region18: #{lstm_forward.1} parent=1 // pred_check
      _
    $region19: #{lstm_forward.1} parent=1 // pred_check_branch
      %39 = sbr.rel (0) target = $region21
    $region20: #{lstm_forward.1} parent=1 // pred_region
      _
    $region21: #{lstm_forward.1} parent=1 // pred_fallthru
      _
    // Predicated region
    $region22: #{lstm_forward.1} parent=1 // pred_check
      _
    $region23: #{lstm_forward.1} parent=1 // pred_check_branch
      %41 = sbr.rel (0) target = $region25
    $region24: #{lstm_forward.1} parent=1 // pred_region
      _
    $region25: #{lstm_forward.1} parent=1 // pred_fallthru
      _
    // Predicated region
    $region26: #{lstm_forward.1} parent=1 // pred_check
      _
    $region27: #{lstm_forward.1} parent=1 // pred_check_branch
      %43 = sbr.rel (0) target = $region29
    $region28: #{lstm_forward.1} parent=1 // pred_region
      _
    $region29: #{lstm_forward.1} parent=1 // pred_fallthru
      _
    // Predicated region
    $region30: #{lstm_forward.1} parent=1 // pred_check
      _
    $region31: #{lstm_forward.1} parent=1 // pred_check_branch
      %45 = sbr.rel (0) target = $region33
    $region32: #{lstm_forward.1} parent=1 // pred_region
      %47 = vsyncadd [#allocation7], 0
      %s48 = sshll.u32 %s7, 4
      %s49 = int_to_ptr.hbm [resolvable:$true] %s48
      %s50 = sshll.u32 [#allocation6], 4
      %s51 = int_to_ptr.vmem [resolvable:$true] %s50
      %56 = dma.hbm_to_vmem [thread:$0]  %s49, 512, %s51, [#allocation7], 128, 128, 8
    $region33: #{lstm_forward.1} parent=1 // pred_fallthru
      _
    // Predicated region
    $region34: #{lstm_forward.1} parent=1 // pred_check
      _
    $region35: #{lstm_forward.1} parent=1 // pred_check_branch
      %58 = sbr.rel (0) target = $region37
    $region36: #{lstm_forward.1} parent=1 // pred_region
      _
    $region37: #{lstm_forward.1} parent=1 // pred_fallthru
      _
    // Predicated region
    $region38: #{lstm_forward.1} parent=1 // pred_check
      _
    $region39: #{lstm_forward.1} parent=1 // pred_check_branch
      %60 = sbr.rel (0) target = $region41
    $region40: #{lstm_forward.1} parent=1 // pred_region
      _
    $region41: #{lstm_forward.1} parent=1 // pred_fallthru
      _
    // Predicated region
    $region42: #{lstm_forward.1} parent=1 // pred_check
      _
    $region43: #{lstm_forward.1} parent=1 // pred_check_branch
      %62 = sbr.rel (0) target = $region45
    $region44: #{lstm_forward.1} parent=1 // pred_region
      _
    $region45: #{lstm_forward.1} parent=1 // pred_fallthru
      _
    // Predicated region
    $region46: #{lstm_forward.1} parent=1 // pred_check
      _
    $region47: #{lstm_forward.1} parent=1 // pred_check_branch
      %64 = sbr.rel (0) target = $region49
    $region48: #{lstm_forward.1} parent=1 // pred_region
      %66 = dma.done [#allocation4], 256
    $region49: #{lstm_forward.1} parent=1 // pred_fallthru
      _
    // Predicated region
    $region50: #{lstm_forward.1} parent=1 // pred_check
      _
    $region51: #{lstm_forward.1} parent=1 // pred_check_branch
      %68 = sbr.rel (0) target = $region53
    $region52: #{lstm_forward.1} parent=1 // pred_region
      %70 = dma.done [#allocation7], 512
    $region53: #{lstm_forward.1} parent=1 // pred_fallthru
      _
    %v71 = vlaneseq
    %v72 = vand.u32 %v71, 127
    %vm73 = vcmp.ge.s32.totalorder %v72, 64
    %vm74 = vcmp.lt.s32.totalorder %v72, 96
    %vm75 = vmand %vm73, %vm74
    %v76 = vld [vmem:[%s0] sm:$0xff]
    %v77 = vld [vmem:[%s0 + $0x8] sm:$0xff]
    %v78 = vld [vmem:[%s0 + $0x10] sm:$0xff]
    %v79 = vld [vmem:[%s0 + $0x18] sm:$0xff]
    %v80 = vld [vmem:[#allocation3] sm:$0xff]
    %v81 = vld [vmem:[#allocation3 + $0x8] sm:$0xff]
    %v82 = vld [vmem:[%s2] sm:$0xff]
    %v83 = vld [vmem:[%s2 + $0x8] sm:$0xff]
    %v84 = vld [vmem:[%s2 + $0x10] sm:$0xff]
    %v85 = vld [vmem:[%s2 + $0x18] sm:$0xff]
    %v86 = vld [vmem:[%s3] sm:$0x1]
    %v88 = vperm.slane %v86, 0
    %vm90 = vcmask 130048
    %v92 = vsel %vm90, %v76, 0
    %v95 = vsel %vm90, %v77, 0
    %v98 = vsel %vm90, %v78, 0
    %v101 = vsel %vm90, %v79, 0
    %103 = vmatpush.msra.mxu0 0.0
    %104 = vmatpush.msra.mxu0 0.0
    %105 = vmatpush.msra.mxu0 0.0
    %106 = vmatpush.msra.mxu0 0.0
    %107 = vmatpush.msra.mxu0 0.0
    %108 = vmatpush.msra.mxu0 0.0
    %109 = vmatpush.msra.mxu0 0.0
    %110 = vmatpush.msra.mxu0 0.0
    %111 = vmatpush.msra.mxu0 0.0
    %112 = vmatpush.msra.mxu0 0.0
    %113 = vmatpush.msra.mxu0 0.0
    %114 = vmatpush.msra.mxu0 0.0
    %115 = vmatpush.msra.mxu0 0.0
    %116 = vmatpush.msra.mxu0 0.0
    %117 = vmatpush.msra.mxu0 %v81
    %118 = vmatpush.msra.mxu0 %v80
    %119 = vmatmul.f32.gmra.mxu0 %v92
    %v120 = vpop.f32.mrf.mxu0
    %v121 = vadd.f32 %v88, %v120
    %122 = vmatmul.f32.gmra.mxu0 %v95
    %v123 = vpop.f32.mrf.mxu0
    %v124 = vadd.f32 %v88, %v123
    %125 = vmatmul.f32.gmra.mxu0 %v98
    %v126 = vpop.f32.mrf.mxu0
    %v127 = vadd.f32 %v88, %v126
    %128 = vmatmul.f32.gmra.mxu0 %v101
    %v129 = vpop.f32.mrf.mxu0
    %v130 = vadd.f32 %v88, %v129
    %131 = vdwg.mxu0
    %vm132 = vcmask 261120
    %v134 = vsel %vm132, 0.0, 0
    %136 = vmatpush.msra.mxu0 0.0
    %137 = vmatpush.msra.mxu0 0.0
    %138 = vmatpush.msra.mxu0 0.0
    %139 = vmatpush.msra.mxu0 0.0
    %140 = vmatpush.msra.mxu0 0.0
    %141 = vmatpush.msra.mxu0 0.0
    %142 = vmatpush.msra.mxu0 0.0
    %143 = vmatpush.msra.mxu0 0.0
    %144 = vmatpush.msra.mxu0 0.0
    %145 = vmatpush.msra.mxu0 0.0
    %146 = vmatpush.msra.mxu0 0.0
    %147 = vmatpush.msra.mxu0 0.0
    %148 = vmatpush.msra.mxu0 %v85
    %149 = vmatpush.msra.mxu0 %v84
    %150 = vmatpush.msra.mxu0 %v83
    %151 = vmatpush.msra.mxu0 %v82
    %152 = vmatmul.f32.gmra.mxu0 %v134
    %v153 = vpop.f32.mrf.mxu0
    %v154 = vadd.f32 0.0, %v153
    %155 = vdwg.mxu0
    %v157 = vrot.slane %v154, 1
    %v158 = vrot.slane %v154, 2
    %v159 = vrot.slane %v154, 3
    %v164 = vadd.f32 %v121, %v154
    %v165 = vadd.f32 %v124, %v157
    %v166 = vadd.f32 %v127, %v158
    %v167 = vadd.f32 %v130, %v159
    %v168 = vmul.f32 %v164, 0.5
    %v169 = vmul.f32 %v165, 0.5
    %v170 = vmul.f32 %v166, 0.5
    %v171 = vmul.f32 %v167, 0.5
    %v176 = vrot.slane %v165, 7
    %vm177 = vcmask 1041409
    %v178 = vsel %vm177, %v176, %v164
    %v179 = vrot.slane %v166, 6
    %vm180 = vcmask 1042434
    %v181 = vsel %vm180, %v179, %v178
    %v182 = vrot.slane %v167, 5
    %vm183 = vcmask 1043459
    %v184 = vsel %vm183, %v182, %v181
    %v190 = vrot.slane %v169, 7
    %v191 = vsel %vm177, %v190, %v168
    %v192 = vrot.slane %v170, 6
    %v193 = vsel %vm180, %v192, %v191
    %v194 = vrot.slane %v171, 5
    %v195 = vsel %vm183, %v194, %v193
    %v197 = vsel %vm75, %v184, %v195
    %v198 = vtanh.pop %v197
    %v199 = vmul.f32 %v198, 0.5
    %v200 = vadd.f32 %v199, 0.5
    %v201 = vsel %vm75, %v198, %v200
    %v202 = vmul.f32 %v201, 0.0
    %204 = vrot.lane.b32.xlu0 %v201, 64
    %v205 = vpop.permute.xlu0 %204
    %v207 = vmul.f32 %v201, %v205
    %209 = vrot.lane.b32.xlu0 %v207, 32
    %v210 = vpop.permute.xlu0 %209
    %v212 = vadd.f32 %v202, %v210
    %v213 = vtanh.pop %v212
    %215 = vrot.lane.b32.xlu0 %v213, 64
    %v216 = vpop.permute.xlu0 %215
    %v218 = vmul.f32 %v201, %v216
    %v220 = vrot.slane %v218, 1
    %v221 = vrot.slane %v218, 2
    %v222 = vrot.slane %v218, 3
    %v223 = vperm.slane %v218, 0
    %v224 = vperm.slane %v220, 0
    %v225 = vperm.slane %v221, 0
    %v226 = vperm.slane %v222, 0
    %227 = vrot.lane.b32.xlu0 %v223, 32
    %v228 = vpop.permute.xlu0 %227
    %229 = vrot.lane.b32.xlu0 %v224, 32
    %v230 = vpop.permute.xlu0 %229
    %231 = vrot.lane.b32.xlu0 %v225, 32
    %v232 = vpop.permute.xlu0 %231
    %233 = vrot.lane.b32.xlu0 %v226, 32
    %v234 = vpop.permute.xlu0 %233
    %vm239 = vcmask 253952
    %240 = vst.msk [vmem:[#allocation2] sm:$0x1] %vm239, %v228
    %241 = vst.msk [vmem:[#allocation2 + $0x8] sm:$0x1] %vm239, %v230
    %242 = vst.msk [vmem:[#allocation2 + $0x10] sm:$0x1] %vm239, %v232
    %243 = vst.msk [vmem:[#allocation2 + $0x18] sm:$0x1] %vm239, %v234
    %244 = vrot.lane.b32.xlu0 %v218, 32
    %v245 = vpop.permute.xlu0 %244
    %v246 = vsel %vm132, %v245, 0
    %248 = vmatpush.msra.mxu0 0.0
    %249 = vmatpush.msra.mxu0 0.0
    %250 = vmatpush.msra.mxu0 0.0
    %251 = vmatpush.msra.mxu0 0.0
    %252 = vmatpush.msra.mxu0 0.0
    %253 = vmatpush.msra.mxu0 0.0
    %254 = vmatpush.msra.mxu0 0.0
    %255 = vmatpush.msra.mxu0 0.0
    %256 = vmatpush.msra.mxu0 0.0
    %257 = vmatpush.msra.mxu0 0.0
    %258 = vmatpush.msra.mxu0 0.0
    %259 = vmatpush.msra.mxu0 0.0
    %260 = vmatpush.msra.mxu0 %v85
    %261 = vmatpush.msra.mxu0 %v84
    %262 = vmatpush.msra.mxu0 %v83
    %263 = vmatpush.msra.mxu0 %v82
    %264 = vmatmul.f32.gmra.mxu0 %v246
    %v265 = vpop.f32.mrf.mxu0
    %v266 = vadd.f32 0.0, %v265
    %267 = vdwg.mxu0
    %v269 = vrot.slane %v266, 7
    %v270 = vrot.slane %v266, 1
    %v271 = vrot.slane %v266, 2
    %v276 = vadd.f32 %v121, %v269
    %v277 = vadd.f32 %v124, %v266
    %v278 = vadd.f32 %v127, %v270
    %v279 = vadd.f32 %v130, %v271
    %v280 = vmul.f32 %v276, 0.5
    %v281 = vmul.f32 %v277, 0.5
    %v282 = vmul.f32 %v278, 0.5
    %v283 = vmul.f32 %v279, 0.5
    %v288 = vrot.slane %v276, 1
    %v289 = vsel %vm177, %v277, %v288
    %v290 = vrot.slane %v278, 7
    %v291 = vsel %vm180, %v290, %v289
    %v292 = vrot.slane %v279, 6
    %v293 = vsel %vm183, %v292, %v291
    %v299 = vrot.slane %v280, 1
    %v300 = vsel %vm177, %v281, %v299
    %v301 = vrot.slane %v282, 7
    %v302 = vsel %vm180, %v301, %v300
    %v303 = vrot.slane %v283, 6
    %v304 = vsel %vm183, %v303, %v302
    %v306 = vsel %vm75, %v293, %v304
    %v307 = vtanh.pop %v306
    %v308 = vmul.f32 %v307, 0.5
    %v309 = vadd.f32 %v308, 0.5
    %v310 = vsel %vm75, %v307, %v309
    %v311 = vmul.f32 %v310, %v212
    %313 = vrot.lane.b32.xlu0 %v310, 64
    %v314 = vpop.permute.xlu0 %313
    %v316 = vmul.f32 %v310, %v314
    %318 = vrot.lane.b32.xlu0 %v316, 32
    %v319 = vpop.permute.xlu0 %318
    %v321 = vadd.f32 %v311, %v319
    %v322 = vtanh.pop %v321
    %324 = vrot.lane.b32.xlu0 %v322, 64
    %v325 = vpop.permute.xlu0 %324
    %v327 = vmul.f32 %v310, %v325
    %v329 = vrot.slane %v327, 1
    %v330 = vrot.slane %v327, 2
    %v331 = vrot.slane %v327, 3
    %v332 = vperm.slane %v327, 0
    %v333 = vperm.slane %v329, 0
    %v334 = vperm.slane %v330, 0
    %v335 = vperm.slane %v331, 0
    %336 = vrot.lane.b32.xlu0 %v332, 32
    %v337 = vpop.permute.xlu0 %336
    %338 = vrot.lane.b32.xlu0 %v333, 32
    %v339 = vpop.permute.xlu0 %338
    %340 = vrot.lane.b32.xlu0 %v334, 32
    %v341 = vpop.permute.xlu0 %340
    %342 = vrot.lane.b32.xlu0 %v335, 32
    %v343 = vpop.permute.xlu0 %342
    %348 = vst.msk [vmem:[#allocation2 + $0x1] sm:$0x1] %vm239, %v337
    %349 = vst.msk [vmem:[#allocation2 + $0x9] sm:$0x1] %vm239, %v339
    %350 = vst.msk [vmem:[#allocation2 + $0x11] sm:$0x1] %vm239, %v341
    %351 = vst.msk [vmem:[#allocation2 + $0x19] sm:$0x1] %vm239, %v343
    %352 = vrot.lane.b32.xlu0 %v327, 32
    %v353 = vpop.permute.xlu0 %352
    %v354 = vsel %vm132, %v353, 0
    %356 = vmatpush.msra.mxu0 0.0
    %357 = vmatpush.msra.mxu0 0.0
    %358 = vmatpush.msra.mxu0 0.0
    %359 = vmatpush.msra.mxu0 0.0
    %360 = vmatpush.msra.mxu0 0.0
    %361 = vmatpush.msra.mxu0 0.0
    %362 = vmatpush.msra.mxu0 0.0
    %363 = vmatpush.msra.mxu0 0.0
    %364 = vmatpush.msra.mxu0 0.0
    %365 = vmatpush.msra.mxu0 0.0
    %366 = vmatpush.msra.mxu0 0.0
    %367 = vmatpush.msra.mxu0 0.0
    %368 = vmatpush.msra.mxu0 %v85
    %369 = vmatpush.msra.mxu0 %v84
    %370 = vmatpush.msra.mxu0 %v83
    %371 = vmatpush.msra.mxu0 %v82
    %372 = vmatmul.f32.gmra.mxu0 %v354
    %v373 = vpop.f32.mrf.mxu0
    %v374 = vadd.f32 0.0, %v373
    %375 = vdwg.mxu0
    %v377 = vrot.slane %v374, 6
    %v378 = vrot.slane %v374, 7
    %v379 = vrot.slane %v374, 1
    %v384 = vadd.f32 %v121, %v377
    %v385 = vadd.f32 %v124, %v378
    %v386 = vadd.f32 %v127, %v374
    %v387 = vadd.f32 %v130, %v379
    %v388 = vmul.f32 %v384, 0.5
    %v389 = vmul.f32 %v385, 0.5
    %v390 = vmul.f32 %v386, 0.5
    %v391 = vmul.f32 %v387, 0.5
    %v396 = vrot.slane %v384, 2
    %v397 = vrot.slane %v385, 1
    %v398 = vsel %vm177, %v397, %v396
    %v399 = vsel %vm180, %v386, %v398
    %v400 = vrot.slane %v387, 7
    %v401 = vsel %vm183, %v400, %v399
    %v407 = vrot.slane %v388, 2
    %v408 = vrot.slane %v389, 1
    %v409 = vsel %vm177, %v408, %v407
    %v410 = vsel %vm180, %v390, %v409
    %v411 = vrot.slane %v391, 7
    %v412 = vsel %vm183, %v411, %v410
    %v414 = vsel %vm75, %v401, %v412
    %v415 = vtanh.pop %v414
    %v416 = vmul.f32 %v415, 0.5
    %v417 = vadd.f32 %v416, 0.5
    %v418 = vsel %vm75, %v415, %v417
    %v419 = vmul.f32 %v418, %v321
    %421 = vrot.lane.b32.xlu0 %v418, 64
    %v422 = vpop.permute.xlu0 %421
    %v424 = vmul.f32 %v418, %v422
    %426 = vrot.lane.b32.xlu0 %v424, 32
    %v427 = vpop.permute.xlu0 %426
    %v429 = vadd.f32 %v419, %v427
    %v430 = vtanh.pop %v429
    %432 = vrot.lane.b32.xlu0 %v430, 64
    %v433 = vpop.permute.xlu0 %432
    %v435 = vmul.f32 %v418, %v433
    %v437 = vrot.slane %v435, 1
    %v438 = vrot.slane %v435, 2
    %v439 = vrot.slane %v435, 3
    %v440 = vperm.slane %v435, 0
    %v441 = vperm.slane %v437, 0
    %v442 = vperm.slane %v438, 0
    %v443 = vperm.slane %v439, 0
    %444 = vrot.lane.b32.xlu0 %v440, 32
    %v445 = vpop.permute.xlu0 %444
    %446 = vrot.lane.b32.xlu0 %v441, 32
    %v447 = vpop.permute.xlu0 %446
    %448 = vrot.lane.b32.xlu0 %v442, 32
    %v449 = vpop.permute.xlu0 %448
    %450 = vrot.lane.b32.xlu0 %v443, 32
    %v451 = vpop.permute.xlu0 %450
    %456 = vst.msk [vmem:[#allocation2 + $0x2] sm:$0x1] %vm239, %v445
    %457 = vst.msk [vmem:[#allocation2 + $0xa] sm:$0x1] %vm239, %v447
    %458 = vst.msk [vmem:[#allocation2 + $0x12] sm:$0x1] %vm239, %v449
    %459 = vst.msk [vmem:[#allocation2 + $0x1a] sm:$0x1] %vm239, %v451
    %460 = vrot.lane.b32.xlu0 %v435, 32
    %v461 = vpop.permute.xlu0 %460
    %v462 = vsel %vm132, %v461, 0
    %464 = vmatpush.msra.mxu0 0.0
    %465 = vmatpush.msra.mxu0 0.0
    %466 = vmatpush.msra.mxu0 0.0
    %467 = vmatpush.msra.mxu0 0.0
    %468 = vmatpush.msra.mxu0 0.0
    %469 = vmatpush.msra.mxu0 0.0
    %470 = vmatpush.msra.mxu0 0.0
    %471 = vmatpush.msra.mxu0 0.0
    %472 = vmatpush.msra.mxu0 0.0
    %473 = vmatpush.msra.mxu0 0.0
    %474 = vmatpush.msra.mxu0 0.0
    %475 = vmatpush.msra.mxu0 0.0
    %476 = vmatpush.msra.mxu0 %v85
    %477 = vmatpush.msra.mxu0 %v84
    %478 = vmatpush.msra.mxu0 %v83
    %479 = vmatpush.msra.mxu0 %v82
    %480 = vmatmul.f32.gmra.mxu0 %v462
    %v481 = vpop.f32.mrf.mxu0
    %v482 = vadd.f32 0.0, %v481
    %483 = vdwg.mxu0
    %v485 = vrot.slane %v482, 5
    %v486 = vrot.slane %v482, 6
    %v487 = vrot.slane %v482, 7
    %v492 = vadd.f32 %v121, %v485
    %v493 = vadd.f32 %v124, %v486
    %v494 = vadd.f32 %v127, %v487
    %v495 = vadd.f32 %v130, %v482
    %v496 = vmul.f32 %v492, 0.5
    %v497 = vmul.f32 %v493, 0.5
    %v498 = vmul.f32 %v494, 0.5
    %v499 = vmul.f32 %v495, 0.5
    %v504 = vrot.slane %v492, 3
    %v505 = vrot.slane %v493, 2
    %v506 = vsel %vm177, %v505, %v504
    %v507 = vrot.slane %v494, 1
    %v508 = vsel %vm180, %v507, %v506
    %v509 = vsel %vm183, %v495, %v508
    %v515 = vrot.slane %v496, 3
    %v516 = vrot.slane %v497, 2
    %v517 = vsel %vm177, %v516, %v515
    %v518 = vrot.slane %v498, 1
    %v519 = vsel %vm180, %v518, %v517
    %v520 = vsel %vm183, %v499, %v519
    %v522 = vsel %vm75, %v509, %v520
    %v523 = vtanh.pop %v522
    %v524 = vmul.f32 %v523, 0.5
    %v525 = vadd.f32 %v524, 0.5
    %v526 = vsel %vm75, %v523, %v525
    %v527 = vmul.f32 %v526, %v429
    %529 = vrot.lane.b32.xlu0 %v526, 64
    %v530 = vpop.permute.xlu0 %529
    %v532 = vmul.f32 %v526, %v530
    %534 = vrot.lane.b32.xlu0 %v532, 32
    %v535 = vpop.permute.xlu0 %534
    %v537 = vadd.f32 %v527, %v535
    %v538 = vtanh.pop %v537
    %540 = vrot.lane.b32.xlu0 %v538, 64
    %v541 = vpop.permute.xlu0 %540
    %v543 = vmul.f32 %v526, %v541
    %v545 = vrot.slane %v543, 1
    %v546 = vrot.slane %v543, 2
    %v547 = vrot.slane %v543, 3
    %v548 = vperm.slane %v543, 0
    %v549 = vperm.slane %v545, 0
    %v550 = vperm.slane %v546, 0
    %v551 = vperm.slane %v547, 0
    %552 = vrot.lane.b32.xlu0 %v548, 32
    %v553 = vpop.permute.xlu0 %552
    %554 = vrot.lane.b32.xlu0 %v549, 32
    %v555 = vpop.permute.xlu0 %554
    %556 = vrot.lane.b32.xlu0 %v550, 32
    %v557 = vpop.permute.xlu0 %556
    %558 = vrot.lane.b32.xlu0 %v551, 32
    %v559 = vpop.permute.xlu0 %558
    %564 = vst.msk [vmem:[#allocation2 + $0x3] sm:$0x1] %vm239, %v553
    %565 = vst.msk [vmem:[#allocation2 + $0xb] sm:$0x1] %vm239, %v555
    %566 = vst.msk [vmem:[#allocation2 + $0x13] sm:$0x1] %vm239, %v557
    %567 = vst.msk [vmem:[#allocation2 + $0x1b] sm:$0x1] %vm239, %v559
    %568 = vrot.lane.b32.xlu0 %v543, 32
    %v569 = vpop.permute.xlu0 %568
    %v570 = vsel %vm132, %v569, 0
    %572 = vmatpush.msra.mxu0 0.0
    %573 = vmatpush.msra.mxu0 0.0
    %574 = vmatpush.msra.mxu0 0.0
    %575 = vmatpush.msra.mxu0 0.0
    %576 = vmatpush.msra.mxu0 0.0
    %577 = vmatpush.msra.mxu0 0.0
    %578 = vmatpush.msra.mxu0 0.0
    %579 = vmatpush.msra.mxu0 0.0
    %580 = vmatpush.msra.mxu0 0.0
    %581 = vmatpush.msra.mxu0 0.0
    %582 = vmatpush.msra.mxu0 0.0
    %583 = vmatpush.msra.mxu0 0.0
    %584 = vmatpush.msra.mxu0 %v85
    %585 = vmatpush.msra.mxu0 %v84
    %586 = vmatpush.msra.mxu0 %v83
    %587 = vmatpush.msra.mxu0 %v82
    %588 = vmatmul.f32.gmra.mxu0 %v570
    %v589 = vpop.f32.mrf.mxu0
    %v590 = vadd.f32 0.0, %v589
    %591 = vdwg.mxu0
    %v593 = vrot.slane %v590, 4
    %v594 = vrot.slane %v590, 5
    %v595 = vrot.slane %v590, 6
    %v596 = vrot.slane %v590, 7
    %v601 = vadd.f32 %v121, %v593
    %v602 = vadd.f32 %v124, %v594
    %v603 = vadd.f32 %v127, %v595
    %v604 = vadd.f32 %v130, %v596
    %v605 = vmul.f32 %v601, 0.5
    %v606 = vmul.f32 %v602, 0.5
    %v607 = vmul.f32 %v603, 0.5
    %v608 = vmul.f32 %v604, 0.5
    %v613 = vrot.slane %v601, 4
    %v614 = vrot.slane %v602, 3
    %v615 = vsel %vm177, %v614, %v613
    %v616 = vrot.slane %v603, 2
    %v617 = vsel %vm180, %v616, %v615
    %v618 = vrot.slane %v604, 1
    %v619 = vsel %vm183, %v618, %v617
    %v625 = vrot.slane %v605, 4
    %v626 = vrot.slane %v606, 3
    %v627 = vsel %vm177, %v626, %v625
    %v628 = vrot.slane %v607, 2
    %v629 = vsel %vm180, %v628, %v627
    %v630 = vrot.slane %v608, 1
    %v631 = vsel %vm183, %v630, %v629
    %v633 = vsel %vm75, %v619, %v631
    %v634 = vtanh.pop %v633
    %v635 = vmul.f32 %v634, 0.5
    %v636 = vadd.f32 %v635, 0.5
    %v637 = vsel %vm75, %v634, %v636
    %v638 = vmul.f32 %v637, %v537
    %640 = vrot.lane.b32.xlu0 %v637, 64
    %v641 = vpop.permute.xlu0 %640
    %v643 = vmul.f32 %v637, %v641
    %645 = vrot.lane.b32.xlu0 %v643, 32
    %v646 = vpop.permute.xlu0 %645
    %v648 = vadd.f32 %v638, %v646
    %v649 = vtanh.pop %v648
    %651 = vrot.lane.b32.xlu0 %v649, 64
    %v652 = vpop.permute.xlu0 %651
    %v654 = vmul.f32 %v637, %v652
    %v656 = vrot.slane %v654, 1
    %v657 = vrot.slane %v654, 2
    %v658 = vrot.slane %v654, 3
    %v659 = vperm.slane %v654, 0
    %v660 = vperm.slane %v656, 0
    %v661 = vperm.slane %v657, 0
    %v662 = vperm.slane %v658, 0
    %663 = vrot.lane.b32.xlu0 %v659, 32
    %v664 = vpop.permute.xlu0 %663
    %665 = vrot.lane.b32.xlu0 %v660, 32
    %v666 = vpop.permute.xlu0 %665
    %667 = vrot.lane.b32.xlu0 %v661, 32
    %v668 = vpop.permute.xlu0 %667
    %669 = vrot.lane.b32.xlu0 %v662, 32
    %v670 = vpop.permute.xlu0 %669
    %675 = vst.msk [vmem:[#allocation2 + $0x4] sm:$0x1] %vm239, %v664
    %676 = vst.msk [vmem:[#allocation2 + $0xc] sm:$0x1] %vm239, %v666
    %677 = vst.msk [vmem:[#allocation2 + $0x14] sm:$0x1] %vm239, %v668
    %678 = vst.msk [vmem:[#allocation2 + $0x1c] sm:$0x1] %vm239, %v670
    %679 = vrot.lane.b32.xlu0 %v654, 32
    %v680 = vpop.permute.xlu0 %679
    %v681 = vsel %vm132, %v680, 0
    %683 = vmatpush.msra.mxu0 0.0
    %684 = vmatpush.msra.mxu0 0.0
    %685 = vmatpush.msra.mxu0 0.0
    %686 = vmatpush.msra.mxu0 0.0
    %687 = vmatpush.msra.mxu0 0.0
    %688 = vmatpush.msra.mxu0 0.0
    %689 = vmatpush.msra.mxu0 0.0
    %690 = vmatpush.msra.mxu0 0.0
    %691 = vmatpush.msra.mxu0 0.0
    %692 = vmatpush.msra.mxu0 0.0
    %693 = vmatpush.msra.mxu0 0.0
    %694 = vmatpush.msra.mxu0 0.0
    %695 = vmatpush.msra.mxu0 %v85
    %696 = vmatpush.msra.mxu0 %v84
    %697 = vmatpush.msra.mxu0 %v83
    %698 = vmatpush.msra.mxu0 %v82
    %699 = vmatmul.f32.gmra.mxu0 %v681
    %v700 = vpop.f32.mrf.mxu0
    %v701 = vadd.f32 0.0, %v700
    %702 = vdwg.mxu0
    %v704 = vrot.slane %v701, 3
    %v705 = vrot.slane %v701, 4
    %v706 = vrot.slane %v701, 5
    %v707 = vrot.slane %v701, 6
    %v712 = vadd.f32 %v121, %v704
    %v713 = vadd.f32 %v124, %v705
    %v714 = vadd.f32 %v127, %v706
    %v715 = vadd.f32 %v130, %v707
    %v716 = vmul.f32 %v712, 0.5
    %v717 = vmul.f32 %v713, 0.5
    %v718 = vmul.f32 %v714, 0.5
    %v719 = vmul.f32 %v715, 0.5
    %v724 = vrot.slane %v712, 5
    %v725 = vrot.slane %v713, 4
    %v726 = vsel %vm177, %v725, %v724
    %v727 = vrot.slane %v714, 3
    %v728 = vsel %vm180, %v727, %v726
    %v729 = vrot.slane %v715, 2
    %v730 = vsel %vm183, %v729, %v728
    %v736 = vrot.slane %v716, 5
    %v737 = vrot.slane %v717, 4
    %v738 = vsel %vm177, %v737, %v736
    %v739 = vrot.slane %v718, 3
    %v740 = vsel %vm180, %v739, %v738
    %v741 = vrot.slane %v719, 2
    %v742 = vsel %vm183, %v741, %v740
    %v744 = vsel %vm75, %v730, %v742
    %v745 = vtanh.pop %v744
    %v746 = vmul.f32 %v745, 0.5
    %v747 = vadd.f32 %v746, 0.5
    %v748 = vsel %vm75, %v745, %v747
    %v749 = vmul.f32 %v748, %v648
    %751 = vrot.lane.b32.xlu0 %v748, 64
    %v752 = vpop.permute.xlu0 %751
    %v754 = vmul.f32 %v748, %v752
    %756 = vrot.lane.b32.xlu0 %v754, 32
    %v757 = vpop.permute.xlu0 %756
    %v759 = vadd.f32 %v749, %v757
    %v760 = vtanh.pop %v759
    %762 = vrot.lane.b32.xlu0 %v760, 64
    %v763 = vpop.permute.xlu0 %762
    %v765 = vmul.f32 %v748, %v763
    %v767 = vrot.slane %v765, 1
    %v768 = vrot.slane %v765, 2
    %v769 = vrot.slane %v765, 3
    %v770 = vperm.slane %v765, 0
    %v771 = vperm.slane %v767, 0
    %v772 = vperm.slane %v768, 0
    %v773 = vperm.slane %v769, 0
    %774 = vrot.lane.b32.xlu0 %v770, 32
    %v775 = vpop.permute.xlu0 %774
    %776 = vrot.lane.b32.xlu0 %v771, 32
    %v777 = vpop.permute.xlu0 %776
    %778 = vrot.lane.b32.xlu0 %v772, 32
    %v779 = vpop.permute.xlu0 %778
    %780 = vrot.lane.b32.xlu0 %v773, 32
    %v781 = vpop.permute.xlu0 %780
    %786 = vst.msk [vmem:[#allocation2 + $0x5] sm:$0x1] %vm239, %v775
    %787 = vst.msk [vmem:[#allocation2 + $0xd] sm:$0x1] %vm239, %v777
    %788 = vst.msk [vmem:[#allocation2 + $0x15] sm:$0x1] %vm239, %v779
    %789 = vst.msk [vmem:[#allocation2 + $0x1d] sm:$0x1] %vm239, %v781
    %790 = vrot.lane.b32.xlu0 %v765, 32
    %v791 = vpop.permute.xlu0 %790
    %v792 = vsel %vm132, %v791, 0
    %794 = vmatpush.msra.mxu0 0.0
    %795 = vmatpush.msra.mxu0 0.0
    %796 = vmatpush.msra.mxu0 0.0
    %797 = vmatpush.msra.mxu0 0.0
    %798 = vmatpush.msra.mxu0 0.0
    %799 = vmatpush.msra.mxu0 0.0
    %800 = vmatpush.msra.mxu0 0.0
    %801 = vmatpush.msra.mxu0 0.0
    %802 = vmatpush.msra.mxu0 0.0
    %803 = vmatpush.msra.mxu0 0.0
    %804 = vmatpush.msra.mxu0 0.0
    %805 = vmatpush.msra.mxu0 0.0
    %806 = vmatpush.msra.mxu0 %v85
    %807 = vmatpush.msra.mxu0 %v84
    %808 = vmatpush.msra.mxu0 %v83
    %809 = vmatpush.msra.mxu0 %v82
    %810 = vmatmul.f32.gmra.mxu0 %v792
    %v811 = vpop.f32.mrf.mxu0
    %v812 = vadd.f32 0.0, %v811
    %813 = vdwg.mxu0
    %v815 = vrot.slane %v812, 2
    %v816 = vrot.slane %v812, 3
    %v817 = vrot.slane %v812, 4
    %v818 = vrot.slane %v812, 5
    %v823 = vadd.f32 %v121, %v815
    %v824 = vadd.f32 %v124, %v816
    %v825 = vadd.f32 %v127, %v817
    %v826 = vadd.f32 %v130, %v818
    %v827 = vmul.f32 %v823, 0.5
    %v828 = vmul.f32 %v824, 0.5
    %v829 = vmul.f32 %v825, 0.5
    %v830 = vmul.f32 %v826, 0.5
    %v835 = vrot.slane %v823, 6
    %v836 = vrot.slane %v824, 5
    %v837 = vsel %vm177, %v836, %v835
    %v838 = vrot.slane %v825, 4
    %v839 = vsel %vm180, %v838, %v837
    %v840 = vrot.slane %v826, 3
    %v841 = vsel %vm183, %v840, %v839
    %v847 = vrot.slane %v827, 6
    %v848 = vrot.slane %v828, 5
    %v849 = vsel %vm177, %v848, %v847
    %v850 = vrot.slane %v829, 4
    %v851 = vsel %vm180, %v850, %v849
    %v852 = vrot.slane %v830, 3
    %v853 = vsel %vm183, %v852, %v851
    %v855 = vsel %vm75, %v841, %v853
    %v856 = vtanh.pop %v855
    %v857 = vmul.f32 %v856, 0.5
    %v858 = vadd.f32 %v857, 0.5
    %v859 = vsel %vm75, %v856, %v858
    %v860 = vmul.f32 %v859, %v759
    %862 = vrot.lane.b32.xlu0 %v859, 64
    %v863 = vpop.permute.xlu0 %862
    %v865 = vmul.f32 %v859, %v863
    %867 = vrot.lane.b32.xlu0 %v865, 32
    %v868 = vpop.permute.xlu0 %867
    %v870 = vadd.f32 %v860, %v868
    %v871 = vtanh.pop %v870
    %873 = vrot.lane.b32.xlu0 %v871, 64
    %v874 = vpop.permute.xlu0 %873
    %v876 = vmul.f32 %v859, %v874
    %v878 = vrot.slane %v876, 1
    %v879 = vrot.slane %v876, 2
    %v880 = vrot.slane %v876, 3
    %v881 = vperm.slane %v876, 0
    %v882 = vperm.slane %v878, 0
    %v883 = vperm.slane %v879, 0
    %v884 = vperm.slane %v880, 0
    %885 = vrot.lane.b32.xlu0 %v881, 32
    %v886 = vpop.permute.xlu0 %885
    %887 = vrot.lane.b32.xlu0 %v882, 32
    %v888 = vpop.permute.xlu0 %887
    %889 = vrot.lane.b32.xlu0 %v883, 32
    %v890 = vpop.permute.xlu0 %889
    %891 = vrot.lane.b32.xlu0 %v884, 32
    %v892 = vpop.permute.xlu0 %891
    %897 = vst.msk [vmem:[#allocation2 + $0x6] sm:$0x1] %vm239, %v886
    %898 = vst.msk [vmem:[#allocation2 + $0xe] sm:$0x1] %vm239, %v888
    %899 = vst.msk [vmem:[#allocation2 + $0x16] sm:$0x1] %vm239, %v890
    %900 = vst.msk [vmem:[#allocation2 + $0x1e] sm:$0x1] %vm239, %v892
    %901 = vrot.lane.b32.xlu0 %v876, 32
    %v902 = vpop.permute.xlu0 %901
    %v903 = vsel %vm132, %v902, 0
    %905 = vmatpush.msra.mxu0 0.0
    %906 = vmatpush.msra.mxu0 0.0
    %907 = vmatpush.msra.mxu0 0.0
    %908 = vmatpush.msra.mxu0 0.0
    %909 = vmatpush.msra.mxu0 0.0
    %910 = vmatpush.msra.mxu0 0.0
    %911 = vmatpush.msra.mxu0 0.0
    %912 = vmatpush.msra.mxu0 0.0
    %913 = vmatpush.msra.mxu0 0.0
    %914 = vmatpush.msra.mxu0 0.0
    %915 = vmatpush.msra.mxu0 0.0
    %916 = vmatpush.msra.mxu0 0.0
    %917 = vmatpush.msra.mxu0 %v85
    %918 = vmatpush.msra.mxu0 %v84
    %919 = vmatpush.msra.mxu0 %v83
    %920 = vmatpush.msra.mxu0 %v82
    %921 = vmatmul.f32.gmra.mxu0 %v903
    %v922 = vpop.f32.mrf.mxu0
    %v923 = vadd.f32 0.0, %v922
    %924 = vdwg.mxu0
    %v926 = vrot.slane %v923, 1
    %v927 = vrot.slane %v923, 2
    %v928 = vrot.slane %v923, 3
    %v929 = vrot.slane %v923, 4
    %v934 = vadd.f32 %v121, %v926
    %v935 = vadd.f32 %v124, %v927
    %v936 = vadd.f32 %v127, %v928
    %v937 = vadd.f32 %v130, %v929
    %v938 = vmul.f32 %v934, 0.5
    %v939 = vmul.f32 %v935, 0.5
    %v940 = vmul.f32 %v936, 0.5
    %v941 = vmul.f32 %v937, 0.5
    %v946 = vrot.slane %v934, 7
    %v947 = vrot.slane %v935, 6
    %v948 = vsel %vm177, %v947, %v946
    %v949 = vrot.slane %v936, 5
    %v950 = vsel %vm180, %v949, %v948
    %v951 = vrot.slane %v937, 4
    %v952 = vsel %vm183, %v951, %v950
    %v958 = vrot.slane %v938, 7
    %v959 = vrot.slane %v939, 6
    %v960 = vsel %vm177, %v959, %v958
    %v961 = vrot.slane %v940, 5
    %v962 = vsel %vm180, %v961, %v960
    %v963 = vrot.slane %v941, 4
    %v964 = vsel %vm183, %v963, %v962
    %v966 = vsel %vm75, %v952, %v964
    %v967 = vtanh.pop %v966
    %v968 = vmul.f32 %v967, 0.5
    %v969 = vadd.f32 %v968, 0.5
    %v970 = vsel %vm75, %v967, %v969
    %v971 = vmul.f32 %v970, %v870
    %973 = vrot.lane.b32.xlu0 %v970, 64
    %v974 = vpop.permute.xlu0 %973
    %v976 = vmul.f32 %v970, %v974
    %978 = vrot.lane.b32.xlu0 %v976, 32
    %v979 = vpop.permute.xlu0 %978
    %v981 = vadd.f32 %v971, %v979
    %v982 = vtanh.pop %v981
    %984 = vrot.lane.b32.xlu0 %v982, 64
    %v985 = vpop.permute.xlu0 %984
    %v987 = vmul.f32 %v970, %v985
    %v989 = vrot.slane %v987, 1
    %v990 = vrot.slane %v987, 2
    %v991 = vrot.slane %v987, 3
    %v992 = vperm.slane %v987, 0
    %v993 = vperm.slane %v989, 0
    %v994 = vperm.slane %v990, 0
    %v995 = vperm.slane %v991, 0
    %996 = vrot.lane.b32.xlu0 %v992, 32
    %v997 = vpop.permute.xlu0 %996
    %998 = vrot.lane.b32.xlu0 %v993, 32
    %v999 = vpop.permute.xlu0 %998
    %1000 = vrot.lane.b32.xlu0 %v994, 32
    %v1001 = vpop.permute.xlu0 %1000
    %1002 = vrot.lane.b32.xlu0 %v995, 32
    %v1003 = vpop.permute.xlu0 %1002
    %1008 = vst.msk [vmem:[#allocation2 + $0x7] sm:$0x1] %vm239, %v997
    %1009 = vst.msk [vmem:[#allocation2 + $0xf] sm:$0x1] %vm239, %v999
    %1010 = vst.msk [vmem:[#allocation2 + $0x17] sm:$0x1] %vm239, %v1001
    %1011 = vst.msk [vmem:[#allocation2 + $0x1f] sm:$0x1] %vm239, %v1003
    %v1012 = vld [vmem:[#allocation2] sm:$0xff]
    %v1013 = vld [vmem:[#allocation2 + $0x8] sm:$0xff]
    %v1014 = vld [vmem:[#allocation2 + $0x10] sm:$0xff]
    %v1015 = vld [vmem:[#allocation2 + $0x18] sm:$0xff]
    %v1016 = vld [vmem:[%s4] sm:$0xff]
    %v1017 = vld [vmem:[%s4 + $0x8] sm:$0xff]
    %v1018 = vld [vmem:[%s4 + $0x10] sm:$0xff]
    %v1019 = vld [vmem:[%s4 + $0x18] sm:$0xff]
    %v1020 = vld [vmem:[%s5] sm:$0xff]
    %v1021 = vld [vmem:[%s5 + $0x8] sm:$0xff]
    %v1022 = vld [vmem:[%s5 + $0x10] sm:$0xff]
    %v1023 = vld [vmem:[%s5 + $0x18] sm:$0xff]
    %v1024 = vld [vmem:[%s6] sm:$0x1]
    %v1026 = vperm.slane %v1024, 0
    %v1029 = vsel %vm132, %v1012, 0
    %v1032 = vsel %vm132, %v1013, 0
    %v1035 = vsel %vm132, %v1014, 0
    %v1038 = vsel %vm132, %v1015, 0
    %1040 = vmatpush.msra.mxu0 0.0
    %1041 = vmatpush.msra.mxu0 0.0
    %1042 = vmatpush.msra.mxu0 0.0
    %1043 = vmatpush.msra.mxu0 0.0
    %1044 = vmatpush.msra.mxu0 0.0
    %1045 = vmatpush.msra.mxu0 0.0
    %1046 = vmatpush.msra.mxu0 0.0
    %1047 = vmatpush.msra.mxu0 0.0
    %1048 = vmatpush.msra.mxu0 0.0
    %1049 = vmatpush.msra.mxu0 0.0
    %1050 = vmatpush.msra.mxu0 0.0
    %1051 = vmatpush.msra.mxu0 0.0
    %1052 = vmatpush.msra.mxu0 %v1019
    %1053 = vmatpush.msra.mxu0 %v1018
    %1054 = vmatpush.msra.mxu0 %v1017
    %1055 = vmatpush.msra.mxu0 %v1016
    %1056 = vmatmul.f32.gmra.mxu0 %v1029
    %v1057 = vpop.f32.mrf.mxu0
    %v1058 = vadd.f32 %v1026, %v1057
    %1059 = vmatmul.f32.gmra.mxu0 %v1032
    %v1060 = vpop.f32.mrf.mxu0
    %v1061 = vadd.f32 %v1026, %v1060
    %1062 = vmatmul.f32.gmra.mxu0 %v1035
    %v1063 = vpop.f32.mrf.mxu0
    %v1064 = vadd.f32 %v1026, %v1063
    %1065 = vmatmul.f32.gmra.mxu0 %v1038
    %v1066 = vpop.f32.mrf.mxu0
    %v1067 = vadd.f32 %v1026, %v1066
    %1068 = vdwg.mxu0
    %1069 = vmatpush.msra.mxu0 0.0
    %1070 = vmatpush.msra.mxu0 0.0
    %1071 = vmatpush.msra.mxu0 0.0
    %1072 = vmatpush.msra.mxu0 0.0
    %1073 = vmatpush.msra.mxu0 0.0
    %1074 = vmatpush.msra.mxu0 0.0
    %1075 = vmatpush.msra.mxu0 0.0
    %1076 = vmatpush.msra.mxu0 0.0
    %1077 = vmatpush.msra.mxu0 0.0
    %1078 = vmatpush.msra.mxu0 0.0
    %1079 = vmatpush.msra.mxu0 0.0
    %1080 = vmatpush.msra.mxu0 0.0
    %1081 = vmatpush.msra.mxu0 %v1023
    %1082 = vmatpush.msra.mxu0 %v1022
    %1083 = vmatpush.msra.mxu0 %v1021
    %1084 = vmatpush.msra.mxu0 %v1020
    %1085 = vmatmul.f32.gmra.mxu0 %v134
    %v1086 = vpop.f32.mrf.mxu0
    %v1087 = vadd.f32 0.0, %v1086
    %1088 = vdwg.mxu0
    %v1090 = vrot.slane %v1087, 1
    %v1091 = vrot.slane %v1087, 2
    %v1092 = vrot.slane %v1087, 3
    %v1097 = vadd.f32 %v1058, %v1087
    %v1098 = vadd.f32 %v1061, %v1090
    %v1099 = vadd.f32 %v1064, %v1091
    %v1100 = vadd.f32 %v1067, %v1092
    %v1101 = vmul.f32 %v1097, 0.5
    %v1102 = vmul.f32 %v1098, 0.5
    %v1103 = vmul.f32 %v1099, 0.5
    %v1104 = vmul.f32 %v1100, 0.5
    %v1109 = vrot.slane %v1098, 7
    %v1110 = vsel %vm177, %v1109, %v1097
    %v1111 = vrot.slane %v1099, 6
    %v1112 = vsel %vm180, %v1111, %v1110
    %v1113 = vrot.slane %v1100, 5
    %v1114 = vsel %vm183, %v1113, %v1112
    %v1120 = vrot.slane %v1102, 7
    %v1121 = vsel %vm177, %v1120, %v1101
    %v1122 = vrot.slane %v1103, 6
    %v1123 = vsel %vm180, %v1122, %v1121
    %v1124 = vrot.slane %v1104, 5
    %v1125 = vsel %vm183, %v1124, %v1123
    %v1127 = vsel %vm75, %v1114, %v1125
    %v1128 = vtanh.pop %v1127
    %v1129 = vmul.f32 %v1128, 0.5
    %v1130 = vadd.f32 %v1129, 0.5
    %v1131 = vsel %vm75, %v1128, %v1130
    %v1132 = vmul.f32 %v1131, 0.0
    %1134 = vrot.lane.b32.xlu0 %v1131, 64
    %v1135 = vpop.permute.xlu0 %1134
    %v1137 = vmul.f32 %v1131, %v1135
    %1139 = vrot.lane.b32.xlu0 %v1137, 32
    %v1140 = vpop.permute.xlu0 %1139
    %v1142 = vadd.f32 %v1132, %v1140
    %v1143 = vtanh.pop %v1142
    %1145 = vrot.lane.b32.xlu0 %v1143, 64
    %v1146 = vpop.permute.xlu0 %1145
    %v1148 = vmul.f32 %v1131, %v1146
    %1150 = vrot.lane.b32.xlu0 %v1148, 32
    %v1151 = vpop.permute.xlu0 %1150
    %v1152 = vsel %vm132, %v1151, 0
    %1154 = vmatpush.msra.mxu0 0.0
    %1155 = vmatpush.msra.mxu0 0.0
    %1156 = vmatpush.msra.mxu0 0.0
    %1157 = vmatpush.msra.mxu0 0.0
    %1158 = vmatpush.msra.mxu0 0.0
    %1159 = vmatpush.msra.mxu0 0.0
    %1160 = vmatpush.msra.mxu0 0.0
    %1161 = vmatpush.msra.mxu0 0.0
    %1162 = vmatpush.msra.mxu0 0.0
    %1163 = vmatpush.msra.mxu0 0.0
    %1164 = vmatpush.msra.mxu0 0.0
    %1165 = vmatpush.msra.mxu0 0.0
    %1166 = vmatpush.msra.mxu0 %v1023
    %1167 = vmatpush.msra.mxu0 %v1022
    %1168 = vmatpush.msra.mxu0 %v1021
    %1169 = vmatpush.msra.mxu0 %v1020
    %1170 = vmatmul.f32.gmra.mxu0 %v1152
    %v1171 = vpop.f32.mrf.mxu0
    %v1172 = vadd.f32 0.0, %v1171
    %1173 = vdwg.mxu0
    %v1175 = vrot.slane %v1172, 7
    %v1176 = vrot.slane %v1172, 1
    %v1177 = vrot.slane %v1172, 2
    %v1182 = vadd.f32 %v1058, %v1175
    %v1183 = vadd.f32 %v1061, %v1172
    %v1184 = vadd.f32 %v1064, %v1176
    %v1185 = vadd.f32 %v1067, %v1177
    %v1186 = vmul.f32 %v1182, 0.5
    %v1187 = vmul.f32 %v1183, 0.5
    %v1188 = vmul.f32 %v1184, 0.5
    %v1189 = vmul.f32 %v1185, 0.5
    %v1194 = vrot.slane %v1182, 1
    %v1195 = vsel %vm177, %v1183, %v1194
    %v1196 = vrot.slane %v1184, 7
    %v1197 = vsel %vm180, %v1196, %v1195
    %v1198 = vrot.slane %v1185, 6
    %v1199 = vsel %vm183, %v1198, %v1197
    %v1205 = vrot.slane %v1186, 1
    %v1206 = vsel %vm177, %v1187, %v1205
    %v1207 = vrot.slane %v1188, 7
    %v1208 = vsel %vm180, %v1207, %v1206
    %v1209 = vrot.slane %v1189, 6
    %v1210 = vsel %vm183, %v1209, %v1208
    %v1212 = vsel %vm75, %v1199, %v1210
    %v1213 = vtanh.pop %v1212
    %v1214 = vmul.f32 %v1213, 0.5
    %v1215 = vadd.f32 %v1214, 0.5
    %v1216 = vsel %vm75, %v1213, %v1215
    %v1217 = vmul.f32 %v1216, %v1142
    %1219 = vrot.lane.b32.xlu0 %v1216, 64
    %v1220 = vpop.permute.xlu0 %1219
    %v1222 = vmul.f32 %v1216, %v1220
    %1224 = vrot.lane.b32.xlu0 %v1222, 32
    %v1225 = vpop.permute.xlu0 %1224
    %v1227 = vadd.f32 %v1217, %v1225
    %v1228 = vtanh.pop %v1227
    %1230 = vrot.lane.b32.xlu0 %v1228, 64
    %v1231 = vpop.permute.xlu0 %1230
    %v1233 = vmul.f32 %v1216, %v1231
    %1235 = vrot.lane.b32.xlu0 %v1233, 32
    %v1236 = vpop.permute.xlu0 %1235
    %v1237 = vsel %vm132, %v1236, 0
    %1239 = vmatpush.msra.mxu0 0.0
    %1240 = vmatpush.msra.mxu0 0.0
    %1241 = vmatpush.msra.mxu0 0.0
    %1242 = vmatpush.msra.mxu0 0.0
    %1243 = vmatpush.msra.mxu0 0.0
    %1244 = vmatpush.msra.mxu0 0.0
    %1245 = vmatpush.msra.mxu0 0.0
    %1246 = vmatpush.msra.mxu0 0.0
    %1247 = vmatpush.msra.mxu0 0.0
    %1248 = vmatpush.msra.mxu0 0.0
    %1249 = vmatpush.msra.mxu0 0.0
    %1250 = vmatpush.msra.mxu0 0.0
    %1251 = vmatpush.msra.mxu0 %v1023
    %1252 = vmatpush.msra.mxu0 %v1022
    %1253 = vmatpush.msra.mxu0 %v1021
    %1254 = vmatpush.msra.mxu0 %v1020
    %1255 = vmatmul.f32.gmra.mxu0 %v1237
    %v1256 = vpop.f32.mrf.mxu0
    %v1257 = vadd.f32 0.0, %v1256
    %1258 = vdwg.mxu0
    %v1260 = vrot.slane %v1257, 6
    %v1261 = vrot.slane %v1257, 7
    %v1262 = vrot.slane %v1257, 1
    %v1267 = vadd.f32 %v1058, %v1260
    %v1268 = vadd.f32 %v1061, %v1261
    %v1269 = vadd.f32 %v1064, %v1257
    %v1270 = vadd.f32 %v1067, %v1262
    %v1271 = vmul.f32 %v1267, 0.5
    %v1272 = vmul.f32 %v1268, 0.5
    %v1273 = vmul.f32 %v1269, 0.5
    %v1274 = vmul.f32 %v1270, 0.5
    %v1279 = vrot.slane %v1267, 2
    %v1280 = vrot.slane %v1268, 1
    %v1281 = vsel %vm177, %v1280, %v1279
    %v1282 = vsel %vm180, %v1269, %v1281
    %v1283 = vrot.slane %v1270, 7
    %v1284 = vsel %vm183, %v1283, %v1282
    %v1290 = vrot.slane %v1271, 2
    %v1291 = vrot.slane %v1272, 1
    %v1292 = vsel %vm177, %v1291, %v1290
    %v1293 = vsel %vm180, %v1273, %v1292
    %v1294 = vrot.slane %v1274, 7
    %v1295 = vsel %vm183, %v1294, %v1293
    %v1297 = vsel %vm75, %v1284, %v1295
    %v1298 = vtanh.pop %v1297
    %v1299 = vmul.f32 %v1298, 0.5
    %v1300 = vadd.f32 %v1299, 0.5
    %v1301 = vsel %vm75, %v1298, %v1300
    %v1302 = vmul.f32 %v1301, %v1227
    %1304 = vrot.lane.b32.xlu0 %v1301, 64
    %v1305 = vpop.permute.xlu0 %1304
    %v1307 = vmul.f32 %v1301, %v1305
    %1309 = vrot.lane.b32.xlu0 %v1307, 32
    %v1310 = vpop.permute.xlu0 %1309
    %v1312 = vadd.f32 %v1302, %v1310
    %v1313 = vtanh.pop %v1312
    %1315 = vrot.lane.b32.xlu0 %v1313, 64
    %v1316 = vpop.permute.xlu0 %1315
    %v1318 = vmul.f32 %v1301, %v1316
    %1320 = vrot.lane.b32.xlu0 %v1318, 32
    %v1321 = vpop.permute.xlu0 %1320
    %v1322 = vsel %vm132, %v1321, 0
    %1324 = vmatpush.msra.mxu0 0.0
    %1325 = vmatpush.msra.mxu0 0.0
    %1326 = vmatpush.msra.mxu0 0.0
    %1327 = vmatpush.msra.mxu0 0.0
    %1328 = vmatpush.msra.mxu0 0.0
    %1329 = vmatpush.msra.mxu0 0.0
    %1330 = vmatpush.msra.mxu0 0.0
    %1331 = vmatpush.msra.mxu0 0.0
    %1332 = vmatpush.msra.mxu0 0.0
    %1333 = vmatpush.msra.mxu0 0.0
    %1334 = vmatpush.msra.mxu0 0.0
    %1335 = vmatpush.msra.mxu0 0.0
    %1336 = vmatpush.msra.mxu0 %v1023
    %1337 = vmatpush.msra.mxu0 %v1022
    %1338 = vmatpush.msra.mxu0 %v1021
    %1339 = vmatpush.msra.mxu0 %v1020
    %1340 = vmatmul.f32.gmra.mxu0 %v1322
    %v1341 = vpop.f32.mrf.mxu0
    %v1342 = vadd.f32 0.0, %v1341
    %1343 = vdwg.mxu0
    %v1345 = vrot.slane %v1342, 5
    %v1346 = vrot.slane %v1342, 6
    %v1347 = vrot.slane %v1342, 7
    %v1352 = vadd.f32 %v1058, %v1345
    %v1353 = vadd.f32 %v1061, %v1346
    %v1354 = vadd.f32 %v1064, %v1347
    %v1355 = vadd.f32 %v1067, %v1342
    %v1356 = vmul.f32 %v1352, 0.5
    %v1357 = vmul.f32 %v1353, 0.5
    %v1358 = vmul.f32 %v1354, 0.5
    %v1359 = vmul.f32 %v1355, 0.5
    %v1364 = vrot.slane %v1352, 3
    %v1365 = vrot.slane %v1353, 2
    %v1366 = vsel %vm177, %v1365, %v1364
    %v1367 = vrot.slane %v1354, 1
    %v1368 = vsel %vm180, %v1367, %v1366
    %v1369 = vsel %vm183, %v1355, %v1368
    %v1375 = vrot.slane %v1356, 3
    %v1376 = vrot.slane %v1357, 2
    %v1377 = vsel %vm177, %v1376, %v1375
    %v1378 = vrot.slane %v1358, 1
    %v1379 = vsel %vm180, %v1378, %v1377
    %v1380 = vsel %vm183, %v1359, %v1379
    %v1382 = vsel %vm75, %v1369, %v1380
    %v1383 = vtanh.pop %v1382
    %v1384 = vmul.f32 %v1383, 0.5
    %v1385 = vadd.f32 %v1384, 0.5
    %v1386 = vsel %vm75, %v1383, %v1385
    %v1387 = vmul.f32 %v1386, %v1312
    %1389 = vrot.lane.b32.xlu0 %v1386, 64
    %v1390 = vpop.permute.xlu0 %1389
    %v1392 = vmul.f32 %v1386, %v1390
    %1394 = vrot.lane.b32.xlu0 %v1392, 32
    %v1395 = vpop.permute.xlu0 %1394
    %v1397 = vadd.f32 %v1387, %v1395
    %v1398 = vtanh.pop %v1397
    %1400 = vrot.lane.b32.xlu0 %v1398, 64
    %v1401 = vpop.permute.xlu0 %1400
    %v1403 = vmul.f32 %v1386, %v1401
    %1405 = vrot.lane.b32.xlu0 %v1403, 32
    %v1406 = vpop.permute.xlu0 %1405
    %v1407 = vsel %vm132, %v1406, 0
    %1409 = vmatpush.msra.mxu0 0.0
    %1410 = vmatpush.msra.mxu0 0.0
    %1411 = vmatpush.msra.mxu0 0.0
    %1412 = vmatpush.msra.mxu0 0.0
    %1413 = vmatpush.msra.mxu0 0.0
    %1414 = vmatpush.msra.mxu0 0.0
    %1415 = vmatpush.msra.mxu0 0.0
    %1416 = vmatpush.msra.mxu0 0.0
    %1417 = vmatpush.msra.mxu0 0.0
    %1418 = vmatpush.msra.mxu0 0.0
    %1419 = vmatpush.msra.mxu0 0.0
    %1420 = vmatpush.msra.mxu0 0.0
    %1421 = vmatpush.msra.mxu0 %v1023
    %1422 = vmatpush.msra.mxu0 %v1022
    %1423 = vmatpush.msra.mxu0 %v1021
    %1424 = vmatpush.msra.mxu0 %v1020
    %1425 = vmatmul.f32.gmra.mxu0 %v1407
    %v1426 = vpop.f32.mrf.mxu0
    %v1427 = vadd.f32 0.0, %v1426
    %1428 = vdwg.mxu0
    %v1430 = vrot.slane %v1427, 4
    %v1431 = vrot.slane %v1427, 5
    %v1432 = vrot.slane %v1427, 6
    %v1433 = vrot.slane %v1427, 7
    %v1438 = vadd.f32 %v1058, %v1430
    %v1439 = vadd.f32 %v1061, %v1431
    %v1440 = vadd.f32 %v1064, %v1432
    %v1441 = vadd.f32 %v1067, %v1433
    %v1442 = vmul.f32 %v1438, 0.5
    %v1443 = vmul.f32 %v1439, 0.5
    %v1444 = vmul.f32 %v1440, 0.5
    %v1445 = vmul.f32 %v1441, 0.5
    %v1450 = vrot.slane %v1438, 4
    %v1451 = vrot.slane %v1439, 3
    %v1452 = vsel %vm177, %v1451, %v1450
    %v1453 = vrot.slane %v1440, 2
    %v1454 = vsel %vm180, %v1453, %v1452
    %v1455 = vrot.slane %v1441, 1
    %v1456 = vsel %vm183, %v1455, %v1454
    %v1462 = vrot.slane %v1442, 4
    %v1463 = vrot.slane %v1443, 3
    %v1464 = vsel %vm177, %v1463, %v1462
    %v1465 = vrot.slane %v1444, 2
    %v1466 = vsel %vm180, %v1465, %v1464
    %v1467 = vrot.slane %v1445, 1
    %v1468 = vsel %vm183, %v1467, %v1466
    %v1470 = vsel %vm75, %v1456, %v1468
    %v1471 = vtanh.pop %v1470
    %v1472 = vmul.f32 %v1471, 0.5
    %v1473 = vadd.f32 %v1472, 0.5
    %v1474 = vsel %vm75, %v1471, %v1473
    %v1475 = vmul.f32 %v1474, %v1397
    %1477 = vrot.lane.b32.xlu0 %v1474, 64
    %v1478 = vpop.permute.xlu0 %1477
    %v1480 = vmul.f32 %v1474, %v1478
    %1482 = vrot.lane.b32.xlu0 %v1480, 32
    %v1483 = vpop.permute.xlu0 %1482
    %v1485 = vadd.f32 %v1475, %v1483
    %v1486 = vtanh.pop %v1485
    %1488 = vrot.lane.b32.xlu0 %v1486, 64
    %v1489 = vpop.permute.xlu0 %1488
    %v1491 = vmul.f32 %v1474, %v1489
    %1493 = vrot.lane.b32.xlu0 %v1491, 32
    %v1494 = vpop.permute.xlu0 %1493
    %v1495 = vsel %vm132, %v1494, 0
    %1497 = vmatpush.msra.mxu0 0.0
    %1498 = vmatpush.msra.mxu0 0.0
    %1499 = vmatpush.msra.mxu0 0.0
    %1500 = vmatpush.msra.mxu0 0.0
    %1501 = vmatpush.msra.mxu0 0.0
    %1502 = vmatpush.msra.mxu0 0.0
    %1503 = vmatpush.msra.mxu0 0.0
    %1504 = vmatpush.msra.mxu0 0.0
    %1505 = vmatpush.msra.mxu0 0.0
    %1506 = vmatpush.msra.mxu0 0.0
    %1507 = vmatpush.msra.mxu0 0.0
    %1508 = vmatpush.msra.mxu0 0.0
    %1509 = vmatpush.msra.mxu0 %v1023
    %1510 = vmatpush.msra.mxu0 %v1022
    %1511 = vmatpush.msra.mxu0 %v1021
    %1512 = vmatpush.msra.mxu0 %v1020
    %1513 = vmatmul.f32.gmra.mxu0 %v1495
    %v1514 = vpop.f32.mrf.mxu0
    %v1515 = vadd.f32 0.0, %v1514
    %1516 = vdwg.mxu0
    %v1518 = vrot.slane %v1515, 3
    %v1519 = vrot.slane %v1515, 4
    %v1520 = vrot.slane %v1515, 5
    %v1521 = vrot.slane %v1515, 6
    %v1526 = vadd.f32 %v1058, %v1518
    %v1527 = vadd.f32 %v1061, %v1519
    %v1528 = vadd.f32 %v1064, %v1520
    %v1529 = vadd.f32 %v1067, %v1521
    %v1530 = vmul.f32 %v1526, 0.5
    %v1531 = vmul.f32 %v1527, 0.5
    %v1532 = vmul.f32 %v1528, 0.5
    %v1533 = vmul.f32 %v1529, 0.5
    %v1538 = vrot.slane %v1526, 5
    %v1539 = vrot.slane %v1527, 4
    %v1540 = vsel %vm177, %v1539, %v1538
    %v1541 = vrot.slane %v1528, 3
    %v1542 = vsel %vm180, %v1541, %v1540
    %v1543 = vrot.slane %v1529, 2
    %v1544 = vsel %vm183, %v1543, %v1542
    %v1550 = vrot.slane %v1530, 5
    %v1551 = vrot.slane %v1531, 4
    %v1552 = vsel %vm177, %v1551, %v1550
    %v1553 = vrot.slane %v1532, 3
    %v1554 = vsel %vm180, %v1553, %v1552
    %v1555 = vrot.slane %v1533, 2
    %v1556 = vsel %vm183, %v1555, %v1554
    %v1558 = vsel %vm75, %v1544, %v1556
    %v1559 = vtanh.pop %v1558
    %v1560 = vmul.f32 %v1559, 0.5
    %v1561 = vadd.f32 %v1560, 0.5
    %v1562 = vsel %vm75, %v1559, %v1561
    %v1563 = vmul.f32 %v1562, %v1485
    %1565 = vrot.lane.b32.xlu0 %v1562, 64
    %v1566 = vpop.permute.xlu0 %1565
    %v1568 = vmul.f32 %v1562, %v1566
    %1570 = vrot.lane.b32.xlu0 %v1568, 32
    %v1571 = vpop.permute.xlu0 %1570
    %v1573 = vadd.f32 %v1563, %v1571
    %v1574 = vtanh.pop %v1573
    %1576 = vrot.lane.b32.xlu0 %v1574, 64
    %v1577 = vpop.permute.xlu0 %1576
    %v1579 = vmul.f32 %v1562, %v1577
    %1581 = vrot.lane.b32.xlu0 %v1579, 32
    %v1582 = vpop.permute.xlu0 %1581
    %v1583 = vsel %vm132, %v1582, 0
    %1585 = vmatpush.msra.mxu0 0.0
    %1586 = vmatpush.msra.mxu0 0.0
    %1587 = vmatpush.msra.mxu0 0.0
    %1588 = vmatpush.msra.mxu0 0.0
    %1589 = vmatpush.msra.mxu0 0.0
    %1590 = vmatpush.msra.mxu0 0.0
    %1591 = vmatpush.msra.mxu0 0.0
    %1592 = vmatpush.msra.mxu0 0.0
    %1593 = vmatpush.msra.mxu0 0.0
    %1594 = vmatpush.msra.mxu0 0.0
    %1595 = vmatpush.msra.mxu0 0.0
    %1596 = vmatpush.msra.mxu0 0.0
    %1597 = vmatpush.msra.mxu0 %v1023
    %1598 = vmatpush.msra.mxu0 %v1022
    %1599 = vmatpush.msra.mxu0 %v1021
    %1600 = vmatpush.msra.mxu0 %v1020
    %1601 = vmatmul.f32.gmra.mxu0 %v1583
    %v1602 = vpop.f32.mrf.mxu0
    %v1603 = vadd.f32 0.0, %v1602
    %1604 = vdwg.mxu0
    %v1606 = vrot.slane %v1603, 2
    %v1607 = vrot.slane %v1603, 3
    %v1608 = vrot.slane %v1603, 4
    %v1609 = vrot.slane %v1603, 5
    %v1614 = vadd.f32 %v1058, %v1606
    %v1615 = vadd.f32 %v1061, %v1607
    %v1616 = vadd.f32 %v1064, %v1608
    %v1617 = vadd.f32 %v1067, %v1609
    %v1618 = vmul.f32 %v1614, 0.5
    %v1619 = vmul.f32 %v1615, 0.5
    %v1620 = vmul.f32 %v1616, 0.5
    %v1621 = vmul.f32 %v1617, 0.5
    %v1626 = vrot.slane %v1614, 6
    %v1627 = vrot.slane %v1615, 5
    %v1628 = vsel %vm177, %v1627, %v1626
    %v1629 = vrot.slane %v1616, 4
    %v1630 = vsel %vm180, %v1629, %v1628
    %v1631 = vrot.slane %v1617, 3
    %v1632 = vsel %vm183, %v1631, %v1630
    %v1638 = vrot.slane %v1618, 6
    %v1639 = vrot.slane %v1619, 5
    %v1640 = vsel %vm177, %v1639, %v1638
    %v1641 = vrot.slane %v1620, 4
    %v1642 = vsel %vm180, %v1641, %v1640
    %v1643 = vrot.slane %v1621, 3
    %v1644 = vsel %vm183, %v1643, %v1642
    %v1646 = vsel %vm75, %v1632, %v1644
    %v1647 = vtanh.pop %v1646
    %v1648 = vmul.f32 %v1647, 0.5
    %v1649 = vadd.f32 %v1648, 0.5
    %v1650 = vsel %vm75, %v1647, %v1649
    %v1651 = vmul.f32 %v1650, %v1573
    %1653 = vrot.lane.b32.xlu0 %v1650, 64
    %v1654 = vpop.permute.xlu0 %1653
    %v1656 = vmul.f32 %v1650, %v1654
    %1658 = vrot.lane.b32.xlu0 %v1656, 32
    %v1659 = vpop.permute.xlu0 %1658
    %v1661 = vadd.f32 %v1651, %v1659
    %v1662 = vtanh.pop %v1661
    %1664 = vrot.lane.b32.xlu0 %v1662, 64
    %v1665 = vpop.permute.xlu0 %1664
    %v1667 = vmul.f32 %v1650, %v1665
    %1669 = vrot.lane.b32.xlu0 %v1667, 32
    %v1670 = vpop.permute.xlu0 %1669
    %v1671 = vsel %vm132, %v1670, 0
    %1673 = vmatpush.msra.mxu0 0.0
    %1674 = vmatpush.msra.mxu0 0.0
    %1675 = vmatpush.msra.mxu0 0.0
    %1676 = vmatpush.msra.mxu0 0.0
    %1677 = vmatpush.msra.mxu0 0.0
    %1678 = vmatpush.msra.mxu0 0.0
    %1679 = vmatpush.msra.mxu0 0.0
    %1680 = vmatpush.msra.mxu0 0.0
    %1681 = vmatpush.msra.mxu0 0.0
    %1682 = vmatpush.msra.mxu0 0.0
    %1683 = vmatpush.msra.mxu0 0.0
    %1684 = vmatpush.msra.mxu0 0.0
    %1685 = vmatpush.msra.mxu0 %v1023
    %1686 = vmatpush.msra.mxu0 %v1022
    %1687 = vmatpush.msra.mxu0 %v1021
    %1688 = vmatpush.msra.mxu0 %v1020
    %1689 = vmatmul.f32.gmra.mxu0 %v1671
    %v1690 = vpop.f32.mrf.mxu0
    %v1691 = vadd.f32 0.0, %v1690
    %1692 = vdwg.mxu0
    %v1694 = vrot.slane %v1691, 1
    %v1695 = vrot.slane %v1691, 2
    %v1696 = vrot.slane %v1691, 3
    %v1697 = vrot.slane %v1691, 4
    %v1702 = vadd.f32 %v1058, %v1694
    %v1703 = vadd.f32 %v1061, %v1695
    %v1704 = vadd.f32 %v1064, %v1696
    %v1705 = vadd.f32 %v1067, %v1697
    %v1706 = vmul.f32 %v1702, 0.5
    %v1707 = vmul.f32 %v1703, 0.5
    %v1708 = vmul.f32 %v1704, 0.5
    %v1709 = vmul.f32 %v1705, 0.5
    %v1714 = vrot.slane %v1702, 7
    %v1715 = vrot.slane %v1703, 6
    %v1716 = vsel %vm177, %v1715, %v1714
    %v1717 = vrot.slane %v1704, 5
    %v1718 = vsel %vm180, %v1717, %v1716
    %v1719 = vrot.slane %v1705, 4
    %v1720 = vsel %vm183, %v1719, %v1718
    %v1726 = vrot.slane %v1706, 7
    %v1727 = vrot.slane %v1707, 6
    %v1728 = vsel %vm177, %v1727, %v1726
    %v1729 = vrot.slane %v1708, 5
    %v1730 = vsel %vm180, %v1729, %v1728
    %v1731 = vrot.slane %v1709, 4
    %v1732 = vsel %vm183, %v1731, %v1730
    %v1734 = vsel %vm75, %v1720, %v1732
    %v1735 = vtanh.pop %v1734
    %v1736 = vmul.f32 %v1735, 0.5
    %v1737 = vadd.f32 %v1736, 0.5
    %v1738 = vsel %vm75, %v1735, %v1737
    %v1739 = vmul.f32 %v1738, %v1661
    %1741 = vrot.lane.b32.xlu0 %v1738, 64
    %v1742 = vpop.permute.xlu0 %1741
    %v1744 = vmul.f32 %v1738, %v1742
    %1746 = vrot.lane.b32.xlu0 %v1744, 32
    %v1747 = vpop.permute.xlu0 %1746
    %v1749 = vadd.f32 %v1739, %v1747
    %v1750 = vtanh.pop %v1749
    %1752 = vrot.lane.b32.xlu0 %v1750, 64
    %v1753 = vpop.permute.xlu0 %1752
    %v1755 = vmul.f32 %v1738, %v1753
    %v1757 = vrot.slane %v1755, 4
    %vm1759 = vcmask 1043456
    %v1760 = vsel %vm1759, %v987, %v1757
    %v1761 = vmax.f32 %v1760, 0.0
    %v1762 = vld [vmem:[#allocation6] sm:$0xff]
    %v1763 = vld [vmem:[#allocation6 + $0x8] sm:$0xff]
    %v1764 = vld [vmem:[#allocation6 + $0x10] sm:$0xff]
    %v1765 = vld [vmem:[#allocation6 + $0x18] sm:$0xff]
    %v1766 = vld [vmem:[%s8] sm:$0x1]
    %v1768 = vperm.slane %v1766, 0
    %1771 = vrot.lane.b32.xlu0 %v1761, 32
    %v1772 = vpop.permute.xlu0 %1771
    %v1773 = vsel %vm132, %v1772, 0
    %1775 = vmatpush.msra.mxu0 0.0
    %1776 = vmatpush.msra.mxu0 0.0
    %1777 = vmatpush.msra.mxu0 0.0
    %1778 = vmatpush.msra.mxu0 0.0
    %1779 = vmatpush.msra.mxu0 0.0
    %1780 = vmatpush.msra.mxu0 0.0
    %1781 = vmatpush.msra.mxu0 0.0
    %1782 = vmatpush.msra.mxu0 0.0
    %1783 = vmatpush.msra.mxu0 0.0
    %1784 = vmatpush.msra.mxu0 0.0
    %1785 = vmatpush.msra.mxu0 0.0
    %1786 = vmatpush.msra.mxu0 0.0
    %1787 = vmatpush.msra.mxu0 %v1765
    %1788 = vmatpush.msra.mxu0 %v1764
    %1789 = vmatpush.msra.mxu0 %v1763
    %1790 = vmatpush.msra.mxu0 %v1762
    %1791 = vmatmul.f32.gmra.mxu0 %v1773
    %v1792 = vpop.f32.mrf.mxu0
    %v1793 = vadd.f32 %v1768, %v1792
    %1794 = vdwg.mxu0
    %v1795 = vmax.f32 %v1793, 0.0
    %v1796 = vld [vmem:[%s9] sm:$0xff]
    %v1797 = vld [vmem:[%s9 + $0x8] sm:$0xff]
    %v1798 = vld [vmem:[%s9 + $0x10] sm:$0xff]
    %v1799 = vld [vmem:[%s9 + $0x18] sm:$0xff]
    %v1800 = vld [vmem:[%s9 + $0x20] sm:$0xff]
    %v1801 = vld [vmem:[%s9 + $0x28] sm:$0xff]
    %v1802 = vld [vmem:[%s9 + $0x30] sm:$0xff]
    %v1803 = vld [vmem:[%s9 + $0x38] sm:$0xff]
    %v1804 = vld [vmem:[%s9 + $0x40] sm:$0xff]
    %v1805 = vld [vmem:[%s9 + $0x48] sm:$0xff]
    %v1806 = vld [vmem:[%s9 + $0x50] sm:$0xff]
    %v1807 = vld [vmem:[%s9 + $0x58] sm:$0xff]
    %v1808 = vld [vmem:[%s9 + $0x60] sm:$0xff]
    %v1809 = vld [vmem:[%s9 + $0x68] sm:$0xff]
    %v1810 = vld [vmem:[%s9 + $0x70] sm:$0xff]
    %v1811 = vld [vmem:[%s9 + $0x78] sm:$0xff]
    %v1812 = vld [vmem:[%s10] sm:$0x1]
    %v1814 = vperm.slane %v1812, 0
    %1816 = vmatpush.msra.mxu0 %v1811
    %1817 = vmatpush.msra.mxu0 %v1810
    %1818 = vmatpush.msra.mxu0 %v1809
    %1819 = vmatpush.msra.mxu0 %v1808
    %1820 = vmatpush.msra.mxu0 %v1807
    %1821 = vmatpush.msra.mxu0 %v1806
    %1822 = vmatpush.msra.mxu0 %v1805
    %1823 = vmatpush.msra.mxu0 %v1804
    %1824 = vmatpush.msra.mxu0 %v1803
    %1825 = vmatpush.msra.mxu0 %v1802
    %1826 = vmatpush.msra.mxu0 %v1801
    %1827 = vmatpush.msra.mxu0 %v1800
    %1828 = vmatpush.msra.mxu0 %v1799
    %1829 = vmatpush.msra.mxu0 %v1798
    %1830 = vmatpush.msra.mxu0 %v1797
    %1831 = vmatpush.msra.mxu0 %v1796
    %1832 = vmatmul.f32.gmra.mxu0 %v1795
    %v1833 = vpop.f32.mrf.mxu0
    %v1834 = vadd.f32 %v1814, %v1833
    %1835 = vdwg.mxu0
    %vm1836 = vcmask 64512
    %1837 = vst.msk [vmem:[#allocation8] sm:$0xff] %vm1836, %v1834
    // Predicated region
    $region54: #{lstm_forward.1} parent=1 // pred_check
      _
    $region55: #{lstm_forward.1} parent=1 // pred_check_branch
      %1839 = sbr.rel (0) target = $region57
    $region56: #{lstm_forward.1} parent=1 // pred_region
      %1841 = vsyncadd [#allocation5], 0
      %s1843 = sshll.u32 [#allocation8], 4
      %s1844 = int_to_ptr.vmem [resolvable:$true] %s1843
      %s1845 = sshll.u32 %s11, 4
      %s1846 = int_to_ptr.hbm [resolvable:$true] %s1845
      %1848 = dma.vmem_to_hbm [thread:$0]  %s1844, 128, %s1846, [#allocation5]
    $region57: #{lstm_forward.1} parent=1 // pred_fallthru
      _
    // Predicated region
    $region58: #{lstm_forward.1} parent=1 // pred_check
      _
    $region59: #{lstm_forward.1} parent=1 // pred_check_branch
      %1850 = sbr.rel (0) target = $region61
    $region60: #{lstm_forward.1} parent=1 // pred_region
      %1852 = dma.done [#allocation5], 128
    $region61: #{lstm_forward.1} parent=1 // pred_fallthru
      _
    %1853 = vsyncpa [#allocation4], 1
    %1854 = vsyncpa [#allocation7], 1
    %1855 = vsyncpa [#allocation5], 1

</llo_original>
